<compile_context>
chip_gen: v7x
topology: tpu7x:2x2x1
jax: 0.10.0
libtpu: 0.0.40
codegen_flags: <defaults>
</compile_context>

<pallas_src>
import math

import jax
import jax.numpy as jnp
from jax.experimental import pallas as pl
from jax.experimental.pallas import tpu as pltpu

# -------------------- model hyperparameters (small test config) --------------------
IN_CHANNELS = 4
MODEL_CHANNELS = 32
OUT_CHANNELS = 8          # e.g. 2 * in_channels (mean + var)
Z_CHANNELS = 16
NUM_RES_BLOCKS = 2
FREQ_DIM = 256            # TimestepEmbedder frequency_embedding_size
N = 8                     # batch of tokens

# Matmul operand dtype: f32 here (keeps the 1e-4 assert tight at toy width);
# flip to jnp.bfloat16 for production widths -- accumulation stays f32 via
# preferred_element_type. Elementwise math always stays f32 (v5e has no bf16 VPU/EUP).
MATMUL_DTYPE = jnp.float32

LANE = 128
OUT_PAD = 128                                   # lane-dense output tile


def _align8(n):
    return (n + 7) & ~7


def _round_up(n, m):
    return ((n + m - 1) // m) * m


# ---- fused adaLN head slab: each head padded to a 128-lane stride ----
HEAD_W = _round_up(MODEL_CHANNELS, LANE)        # per-head lane stride (vreg aligned)
NUM_HEADS = 3 * NUM_RES_BLOCKS + 2              # shift/scale/gate per block + final shift/scale
MOD_W_PAD = NUM_HEADS * HEAD_W
WW_COLS = MOD_W_PAD + OUT_PAD                   # [ heads | padded final linear ]

# ---- packed K-stacked weight slab: row offsets (sections 8-row aligned; the
#      input-proj and cond-embed sections are 128 rows so the kernel can feed the
#      full 128-lane input-slab sections straight into the MXU, no lane extract) ----
OFF_IN = 0                                      # input_proj        [128(pad IN), C]
OFF_T1 = OFF_IN + LANE                          # time_embed.mlp[0] [FREQ, C]
OFF_T2 = OFF_T1 + FREQ_DIM                      # time_embed.mlp[2] [C, C]
OFF_C = _align8(OFF_T2 + MODEL_CHANNELS)        # cond_embed        [128(pad Z), C]
OFF_MLP = _align8(OFF_C + LANE)                 # per-block mlp1/mlp2 [2*R*C, C]
WK_ROWS = _align8(OFF_MLP + 2 * NUM_RES_BLOCKS * MODEL_CHANNELS)

# ---- packed bias / LayerNorm slab: row indices ----
ROW_B_IN = 0
ROW_B_T1 = 1
ROW_B_TC = 2
ROW_B_MOD = 3                                   # fused head biases, head h at h*HEAD_W
ROW_B_MLP1 = 4
ROW_B_MLP2 = ROW_B_MLP1 + NUM_RES_BLOCKS
ROW_LN_G = ROW_B_MLP2 + NUM_RES_BLOCKS
ROW_LN_B = ROW_LN_G + NUM_RES_BLOCKS
ROW_B_OUT = ROW_LN_B + NUM_RES_BLOCKS
P_ROWS = _align8(ROW_B_OUT + 1)
P_COLS = max(MOD_W_PAD, OUT_PAD)

# ---- packed input slab: lane offsets (all sections 128-lane aligned) ----
INP_TFREQ = 0                                   # [N, 256] sinusoidal features
INP_X = FREQ_DIM                                # [N, 128] x zero-padded
INP_C = FREQ_DIM + LANE                         # [N, 128] c zero-padded
INP_COLS = FREQ_DIM + 2 * LANE                  # 512


# -------------------- helpers (used in-kernel and in the reference) --------------------
def _silu(v):
    return v * jax.nn.sigmoid(v)


def _layernorm(h, eps=1e-6):
    # PyTorch LayerNorm: biased variance over the last dim. (MAR uses eps=1e-6.)
    mu = jnp.mean(h, axis=-1, keepdims=True)
    var = jnp.mean(jnp.square(h - mu), axis=-1, keepdims=True)
    return (h - mu) * jax.lax.rsqrt(var + eps)


def timestep_embedding(t, dim, max_period=10000):
    half = dim // 2
    freqs = jnp.exp(-math.log(max_period) * jnp.arange(half, dtype=jnp.float32) / half)
    args = t.astype(jnp.float32)[:, None] * freqs[None, :]
    return jnp.concatenate([jnp.cos(args), jnp.sin(args)], axis=-1)


# -------------------- the Pallas kernel (one batch tile per grid step) --------------------
def mlp_adaln_kernel(inp_ref, wk_ref, ww_ref, p_ref, out_ref):
    C = MODEL_CHANNELS
    R = NUM_RES_BLOCKS

    def dot(a, b):
        return jnp.dot(a.astype(MATMUL_DTYPE), b.astype(MATMUL_DTYPE),
                       preferred_element_type=jnp.float32)

    # ---- unpack the input slab (all sections 128-lane aligned) ----
    inp = inp_ref[...]
    tfreq = inp[:, INP_TFREQ:INP_TFREQ + FREQ_DIM]   # [tn, 256]
    x_lane = inp[:, INP_X:INP_X + LANE]              # [tn, 128] (x zero-padded)
    c_lane = inp[:, INP_C:INP_C + LANE]              # [tn, 128] (c zero-padded)

    # ---- unpack the bias / LN slab (tiny, stays in vregs) ----
    p = p_ref[...]
    b_in = p[ROW_B_IN:ROW_B_IN + 1, :C]
    b_t1 = p[ROW_B_T1:ROW_B_T1 + 1, :C]
    b_tc = p[ROW_B_TC:ROW_B_TC + 1, :C]              # b_t2 + b_c folded at pack time
    b_mod = p[ROW_B_MOD:ROW_B_MOD + 1, :MOD_W_PAD]
    b_out = p[ROW_B_OUT:ROW_B_OUT + 1, :OUT_PAD]

    # ---- input projection: x = input_proj(x)  (K padded to 128 -> no lane extract) ----
    x = dot(x_lane, wk_ref[OFF_IN:OFF_IN + LANE, :]) + b_in

    # ---- time-embed first linear + SiLU ----
    t1 = _silu(dot(tfreq, wk_ref[OFF_T1:OFF_T1 + FREQ_DIM, :]) + b_t1)

    # ---- time_embed.mlp[2] + cond_embed, fused bias, no scratch round-trip ----
    y = (dot(t1, wk_ref[OFF_T2:OFF_T2 + C, :])
         + dot(c_lane, wk_ref[OFF_C:OFF_C + LANE, :]) + b_tc)
    sy = _silu(y)   # the SiLU that opens every adaLN_modulation head

    # ---- ONE lane-dense matmul for all (3R + 2) adaLN modulation heads ----
    mods = dot(sy, ww_ref[:, 0:MOD_W_PAD]) + b_mod   # [tn, NUM_HEADS * HEAD_W]

    # ---- residual adaLN blocks (statically unrolled) ----
    for r in range(R):
        shift = mods[:, (3 * r + 0) * HEAD_W:(3 * r + 0) * HEAD_W + C]
        scale = mods[:, (3 * r + 1) * HEAD_W:(3 * r + 1) * HEAD_W + C]
        gate = mods[:, (3 * r + 2) * HEAD_W:(3 * r + 2) * HEAD_W + C]

        ln_g = p[ROW_LN_G + r:ROW_LN_G + r + 1, :C]
        ln_b = p[ROW_LN_B + r:ROW_LN_B + r + 1, :C]
        b1 = p[ROW_B_MLP1 + r:ROW_B_MLP1 + r + 1, :C]
        b2 = p[ROW_B_MLP2 + r:ROW_B_MLP2 + r + 1, :C]
        o = OFF_MLP + 2 * r * C

        h = _layernorm(x) * ln_g + ln_b                       # in_ln (affine)
        h = h * (1.0 + scale) + shift                         # modulate
        h = _silu(dot(h, wk_ref[o:o + C, :]) + b1)            # MLP
        h = dot(h, wk_ref[o + C:o + 2 * C, :]) + b2
        x = x + gate * h                                      # gated residual

    # ---- final layer (norm_final has no affine) ----
    fshift = mods[:, (3 * R + 0) * HEAD_W:(3 * R + 0) * HEAD_W + C]
    fscale = mods[:, (3 * R + 1) * HEAD_W:(3 * R + 1) * HEAD_W + C]
    h = _layernorm(x) * (1.0 + fscale) + fshift
    out_ref[...] = dot(h, ww_ref[:, MOD_W_PAD:MOD_W_PAD + OUT_PAD]) + b_out  # [tn, 128]


# -------------------- packing (wrapper-side, once per parameter set) --------------------
def pack_params(params):
    (w_in, b_in, w_t1, b_t1, w_t2, b_t2, w_c, b_c,
     ln_g, ln_b, w_ada, b_ada, w_mlp1, b_mlp1, w_mlp2, b_mlp2,
     w_fada, b_fada, w_out, b_out) = params
    C = MODEL_CHANNELS
    R = NUM_RES_BLOCKS

    # slab 1: every weight with a C-wide output, K-stacked (padded / 8-row aligned sections)
    wk = jnp.zeros((WK_ROWS, C), jnp.float32)
    wk = wk.at[OFF_IN:OFF_IN + IN_CHANNELS].set(w_in)
    wk = wk.at[OFF_T1:OFF_T1 + FREQ_DIM].set(w_t1)
    wk = wk.at[OFF_T2:OFF_T2 + C].set(w_t2)
    wk = wk.at[OFF_C:OFF_C + Z_CHANNELS].set(w_c)
    for r in range(R):
        o = OFF_MLP + 2 * r * C
        wk = wk.at[o:o + C].set(w_mlp1[r])
        wk = wk.at[o + C:o + 2 * C].set(w_mlp2[r])

    # slab 2: wide-output weights, lane-concatenated with each adaLN head padded
    # to a 128-lane stride, followed by the zero-padded final linear.
    ww = jnp.zeros((C, WW_COLS), jnp.float32)
    heads = [w_ada[i] for i in range(3 * R)] + [w_fada[0], w_fada[1]]
    for h, wh in enumerate(heads):
        ww = ww.at[:, h * HEAD_W:h * HEAD_W + C].set(wh)
    ww = ww.at[:, MOD_W_PAD:MOD_W_PAD + OUT_CHANNELS].set(w_out)

    # slab 3: every bias / LayerNorm affine, row-stacked into one small array
    pp = jnp.zeros((P_ROWS, P_COLS), jnp.float32)
    pp = pp.at[ROW_B_IN, :C].set(b_in[0])
    pp = pp.at[ROW_B_T1, :C].set(b_t1[0])
    pp = pp.at[ROW_B_TC, :C].set(b_t2[0] + b_c[0])
    head_biases = [b_ada[i] for i in range(3 * R)] + [b_fada[0], b_fada[1]]
    for h, bh in enumerate(head_biases):
        pp = pp.at[ROW_B_MOD, h * HEAD_W:h * HEAD_W + C].set(bh[0])
    for r in range(R):
        pp = pp.at[ROW_B_MLP1 + r, :C].set(b_mlp1[r, 0])
        pp = pp.at[ROW_B_MLP2 + r, :C].set(b_mlp2[r, 0])
        pp = pp.at[ROW_LN_G + r, :C].set(ln_g[r, 0])
        pp = pp.at[ROW_LN_B + r, :C].set(ln_b[r, 0])
    pp = pp.at[ROW_B_OUT, :OUT_CHANNELS].set(b_out[0])

    # Weight slabs stored in the matmul operand dtype (bf16 halves DMA/VMEM at prod).
    return wk.astype(MATMUL_DTYPE), ww.astype(MATMUL_DTYPE), pp


def pack_inputs(x, t, c):
    tfreq = timestep_embedding(t, FREQ_DIM)                               # [N, 256]
    x_pad = jnp.pad(x.astype(jnp.float32), ((0, 0), (0, LANE - IN_CHANNELS)))
    c_pad = jnp.pad(c.astype(jnp.float32), ((0, 0), (0, LANE - Z_CHANNELS)))
    return jnp.concatenate([tfreq, x_pad, c_pad], axis=-1)                # [N, 512]


def _choose_tile_n(n):
    # 128-512 row tiles once batches are real; at toy N just one 8-row tile.
    if n >= 512:
        return 512
    if n >= 256:
        return 256
    if n >= 128:
        return 128
    return _align8(max(n, 8))


# -------------------- wrapper --------------------
@jax.jit
def simple_mlp_adaln(x, t, c, packed):
    wk, ww, pp = packed
    n = x.shape[0]
    C = MODEL_CHANNELS
    R = NUM_RES_BLOCKS

    inp = pack_inputs(x, t, c)
    tile_n = _choose_tile_n(n)
    n_pad = _round_up(n, tile_n)
    if n_pad != n:
        inp = jnp.pad(inp, ((0, n_pad - n), (0, 0)))
    grid = (n_pad // tile_n,)

    # Advisory cost model for XLA scheduling around the custom call.
    flops = 2 * n_pad * (LANE * C + FREQ_DIM * C + C * C + LANE * C
                         + C * MOD_W_PAD + 2 * R * C * C + C * OUT_PAD)
    transcendentals = n_pad * (C * (2 + R) + (R + 1))
    bytes_accessed = (inp.size * inp.dtype.itemsize + wk.size * wk.dtype.itemsize
                      + ww.size * ww.dtype.itemsize + pp.size * pp.dtype.itemsize
                      + n_pad * OUT_PAD * 4)

    out_pad = pl.pallas_call(
        mlp_adaln_kernel,
        out_shape=jax.ShapeDtypeStruct((n_pad, OUT_PAD), jnp.float32),
        grid_spec=pltpu.PrefetchScalarGridSpec(
            num_scalar_prefetch=0,
            grid=grid,
            in_specs=[
                # batch-tiled input slab
                pl.BlockSpec((tile_n, INP_COLS), lambda i: (i, 0)),
                # parameter slabs: constant block index -> loaded once, VMEM-resident
                pl.BlockSpec((WK_ROWS, MODEL_CHANNELS), lambda i: (0, 0)),
                pl.BlockSpec((MODEL_CHANNELS, WW_COLS), lambda i: (0, 0)),
                pl.BlockSpec((P_ROWS, P_COLS), lambda i: (0, 0)),
            ],
            out_specs=pl.BlockSpec((tile_n, OUT_PAD), lambda i: (i, 0)),
        ),
        compiler_params=pltpu.CompilerParams(
            dimension_semantics=("parallel",),        # v7x: split batch across 2 TCs
            vmem_limit_bytes=32 * 1024 * 1024,        # raise over v5e's 16 MiB default
        ),
        cost_estimate=pl.CostEstimate(flops=flops,
                                      transcendentals=transcendentals,
                                      bytes_accessed=bytes_accessed),
    )(inp, wk, ww, pp)
    return out_pad[:n, :OUT_CHANNELS]


# -------------------- pure-JAX reference (same math, unpacked params) --------------------
def reference_forward(x, t, c, params):
    (w_in, b_in, w_t1, b_t1, w_t2, b_t2, w_c, b_c,
     ln_g, ln_b, w_ada, b_ada, w_mlp1, b_mlp1, w_mlp2, b_mlp2,
     w_fada, b_fada, w_out, b_out) = params

    tfreq = timestep_embedding(t, FREQ_DIM)
    x = x @ w_in + b_in
    te = _silu(tfreq @ w_t1 + b_t1) @ w_t2 + b_t2
    ce = c @ w_c + b_c
    sy = _silu(te + ce)
    for r in range(NUM_RES_BLOCKS):
        shift = sy @ w_ada[3 * r + 0] + b_ada[3 * r + 0]
        scale = sy @ w_ada[3 * r + 1] + b_ada[3 * r + 1]
        gate = sy @ w_ada[3 * r + 2] + b_ada[3 * r + 2]
        h = _layernorm(x) * ln_g[r] + ln_b[r]
        h = h * (1.0 + scale) + shift
        h = _silu(h @ w_mlp1[r] + b_mlp1[r]) @ w_mlp2[r] + b_mlp2[r]
        x = x + gate * h
    shift = sy @ w_fada[0] + b_fada[0]
    scale = sy @ w_fada[1] + b_fada[1]
    h = _layernorm(x) * (1.0 + scale) + shift
    return h @ w_out + b_out


# -------------------- deterministic parameter construction --------------------
def make_params(key):
    C, R = MODEL_CHANNELS, NUM_RES_BLOCKS
    ks = iter(jax.random.split(key, 32))

    def w(shape, scale=0.05):
        return (scale * jax.random.normal(next(ks), shape)).astype(jnp.float32)

    params = [
        w((IN_CHANNELS, C)), w((1, C)),             # input_proj
        w((FREQ_DIM, C), 0.02), w((1, C)),          # time_embed.mlp[0]
        w((C, C), 0.02), w((1, C)),                 # time_embed.mlp[2]
        w((Z_CHANNELS, C)), w((1, C)),              # cond_embed
        jnp.ones((R, 1, C), jnp.float32),           # in_ln gamma
        jnp.zeros((R, 1, C), jnp.float32),          # in_ln beta
        w((3 * R, C, C)), w((3 * R, 1, C)),         # adaLN_modulation (per block, chunked)
        w((R, C, C)), w((R, 1, C)),                 # block mlp[0]
        w((R, C, C)), w((R, 1, C)),                 # block mlp[2]
        w((2, C, C)), w((2, 1, C)),                 # final adaLN_modulation (chunked)
        w((C, OUT_CHANNELS)), w((1, OUT_CHANNELS)), # final linear
    ]
    return params


# -------------------- main --------------------
if __name__ == "__main__":
    key = jax.random.PRNGKey(0)
    k_x, k_t, k_c, k_p = jax.random.split(key, 4)

    x = jax.random.normal(k_x, (N, IN_CHANNELS), dtype=jnp.float32)
    t = jax.random.uniform(k_t, (N,), dtype=jnp.float32, minval=0.0, maxval=1000.0)
    c = jax.random.normal(k_c, (N, Z_CHANNELS), dtype=jnp.float32)
    params = make_params(k_p)
    packed = pack_params(params)

    out = jax.block_until_ready(simple_mlp_adaln(x, t, c, packed))
    ref = jax.block_until_ready(reference_forward(x, t, c, params))

    assert out.shape == (N, OUT_CHANNELS)
    assert jnp.allclose(out, ref, atol=1e-4, rtol=1e-4), (
        f"mismatch: max abs err = {jnp.max(jnp.abs(out - ref))}")
    print("KERNEL_OK")
</pallas_src>

<mosaic_0001>
module attributes {stable_mosaic.version = 11 : i64} {
  func.func @mlp_adaln_kernel(%arg0: i32, %arg1: memref<8x512xf32, #tpu.memory_space<vmem>>, %arg2: memref<672x32xf32, #tpu.memory_space<vmem>>, %arg3: memref<32x1152xf32, #tpu.memory_space<vmem>>, %arg4: memref<16x1024xf32, #tpu.memory_space<vmem>>, %arg5: memref<8x128xf32, #tpu.memory_space<vmem>>) attributes {dimension_semantics = [#tpu.dimension_semantics<parallel>], iteration_bounds = array<i64: 1>, scalar_prefetch = 0 : i64, scratch_operands = 0 : i64, tpu.core_type = #tpu.core_type<tc>, window_params = [{transform_indices = @transform_0, window_bounds = array<i64: 8, 512>}, {pipeline_mode = #tpu.pipeline_mode<synchronous>, transform_indices = @transform_1, window_bounds = array<i64: 672, 32>}, {pipeline_mode = #tpu.pipeline_mode<synchronous>, transform_indices = @transform_2, window_bounds = array<i64: 32, 1152>}, {pipeline_mode = #tpu.pipeline_mode<synchronous>, transform_indices = @transform_3, window_bounds = array<i64: 16, 1024>}, {transform_indices = @transform_4, window_bounds = array<i64: 8, 128>}]} {
    %c0 = arith.constant 0 : index
    %c0_0 = arith.constant 0 : index
    %0 = vector.load %arg1[%c0, %c0_0] : memref<8x512xf32, #tpu.memory_space<vmem>>, vector<8x512xf32>
    %1 = vector.extract_strided_slice %0 {offsets = [0, 0], sizes = [8, 256], strides = [1, 1]} : vector<8x512xf32> to vector<8x256xf32>
    %2 = vector.extract_strided_slice %0 {offsets = [0, 256], sizes = [8, 128], strides = [1, 1]} : vector<8x512xf32> to vector<8x128xf32>
    %3 = vector.extract_strided_slice %0 {offsets = [0, 384], sizes = [8, 128], strides = [1, 1]} : vector<8x512xf32> to vector<8x128xf32>
    %c0_1 = arith.constant 0 : index
    %c0_2 = arith.constant 0 : index
    %4 = vector.load %arg4[%c0_1, %c0_2] : memref<16x1024xf32, #tpu.memory_space<vmem>>, vector<16x1024xf32>
    %5 = vector.extract_strided_slice %4 {offsets = [0, 0], sizes = [1, 32], strides = [1, 1]} : vector<16x1024xf32> to vector<1x32xf32>
    %6 = vector.extract_strided_slice %4 {offsets = [1, 0], sizes = [1, 32], strides = [1, 1]} : vector<16x1024xf32> to vector<1x32xf32>
    %7 = vector.extract_strided_slice %4 {offsets = [2, 0], sizes = [1, 32], strides = [1, 1]} : vector<16x1024xf32> to vector<1x32xf32>
    %8 = vector.extract_strided_slice %4 {offsets = [3, 0], sizes = [1, 1024], strides = [1, 1]} : vector<16x1024xf32> to vector<1x1024xf32>
    %9 = vector.extract_strided_slice %4 {offsets = [12, 0], sizes = [1, 128], strides = [1, 1]} : vector<16x1024xf32> to vector<1x128xf32>
    %c0_3 = arith.constant 0 : index
    %c0_4 = arith.constant 0 : index
    %10 = vector.load %arg2[%c0_3, %c0_4] : memref<672x32xf32, #tpu.memory_space<vmem>>, vector<128x32xf32>
    %cst = arith.constant dense<0.000000e+00> : vector<8x32xf32>
    %11 = tpu.matmul %2, %10, %cst {dimension_numbers = #tpu.dot_dimension_numbers<[1], [0], [0], [1], [0, 0, 1, 1], [], []>} : vector<8x128xf32>, vector<128x32xf32>, vector<8x32xf32> -> vector<8x32xf32>
    %12 = vector.broadcast %5 : vector<1x32xf32> to vector<8x32xf32>
    %13 = arith.addf %11, %12 : vector<8x32xf32>
    %c128 = arith.constant 128 : index
    %c0_5 = arith.constant 0 : index
    %14 = vector.load %arg2[%c128, %c0_5] : memref<672x32xf32, #tpu.memory_space<vmem>>, vector<256x32xf32>
    %cst_6 = arith.constant dense<0.000000e+00> : vector<8x32xf32>
    %15 = tpu.matmul %1, %14, %cst_6 {dimension_numbers = #tpu.dot_dimension_numbers<[1], [0], [0], [1], [0, 0, 1, 1], [], []>} : vector<8x256xf32>, vector<256x32xf32>, vector<8x32xf32> -> vector<8x32xf32>
    %16 = vector.broadcast %6 : vector<1x32xf32> to vector<8x32xf32>
    %17 = arith.addf %15, %16 : vector<8x32xf32>
    %18 = arith.negf %17 : vector<8x32xf32>
    %19 = math.exp %18 : vector<8x32xf32>
    %cst_7 = arith.constant 1.000000e+00 : f32
    %20 = vector.broadcast %cst_7 : f32 to vector<8x32xf32>
    %21 = arith.addf %20, %19 : vector<8x32xf32>
    %22 = arith.divf %20, %21 : vector<8x32xf32>
    %23 = arith.mulf %17, %22 : vector<8x32xf32>
    %c384 = arith.constant 384 : index
    %c0_8 = arith.constant 0 : index
    %24 = vector.load %arg2[%c384, %c0_8] : memref<672x32xf32, #tpu.memory_space<vmem>>, vector<32x32xf32>
    %cst_9 = arith.constant dense<0.000000e+00> : vector<8x32xf32>
    %25 = tpu.matmul %23, %24, %cst_9 {dimension_numbers = #tpu.dot_dimension_numbers<[1], [0], [0], [1], [0, 0, 1, 1], [], []>} : vector<8x32xf32>, vector<32x32xf32>, vector<8x32xf32> -> vector<8x32xf32>
    %c416 = arith.constant 416 : index
    %c0_10 = arith.constant 0 : index
    %26 = vector.load %arg2[%c416, %c0_10] : memref<672x32xf32, #tpu.memory_space<vmem>>, vector<128x32xf32>
    %cst_11 = arith.constant dense<0.000000e+00> : vector<8x32xf32>
    %27 = tpu.matmul %3, %26, %cst_11 {dimension_numbers = #tpu.dot_dimension_numbers<[1], [0], [0], [1], [0, 0, 1, 1], [], []>} : vector<8x128xf32>, vector<128x32xf32>, vector<8x32xf32> -> vector<8x32xf32>
    %28 = arith.addf %25, %27 : vector<8x32xf32>
    %29 = vector.broadcast %7 : vector<1x32xf32> to vector<8x32xf32>
    %30 = arith.addf %28, %29 : vector<8x32xf32>
    %31 = arith.negf %30 : vector<8x32xf32>
    %32 = math.exp %31 : vector<8x32xf32>
    %cst_12 = arith.constant 1.000000e+00 : f32
    %33 = vector.broadcast %cst_12 : f32 to vector<8x32xf32>
    %34 = arith.addf %33, %32 : vector<8x32xf32>
    %35 = arith.divf %33, %34 : vector<8x32xf32>
    %36 = arith.mulf %30, %35 : vector<8x32xf32>
    %c0_13 = arith.constant 0 : index
    %c0_14 = arith.constant 0 : index
    %37 = vector.load %arg3[%c0_13, %c0_14] : memref<32x1152xf32, #tpu.memory_space<vmem>>, vector<32x1024xf32>
    %cst_15 = arith.constant dense<0.000000e+00> : vector<8x1024xf32>
    %38 = tpu.matmul %36, %37, %cst_15 {dimension_numbers = #tpu.dot_dimension_numbers<[1], [0], [0], [1], [0, 0, 1, 1], [], []>} : vector<8x32xf32>, vector<32x1024xf32>, vector<8x1024xf32> -> vector<8x1024xf32>
    %39 = vector.broadcast %8 : vector<1x1024xf32> to vector<8x1024xf32>
    %40 = arith.addf %38, %39 : vector<8x1024xf32>
    %41 = vector.extract_strided_slice %40 {offsets = [0, 0], sizes = [8, 32], strides = [1, 1]} : vector<8x1024xf32> to vector<8x32xf32>
    %42 = vector.extract_strided_slice %40 {offsets = [0, 128], sizes = [8, 32], strides = [1, 1]} : vector<8x1024xf32> to vector<8x32xf32>
    %43 = vector.extract_strided_slice %40 {offsets = [0, 256], sizes = [8, 32], strides = [1, 1]} : vector<8x1024xf32> to vector<8x32xf32>
    %44 = vector.extract_strided_slice %4 {offsets = [8, 0], sizes = [1, 32], strides = [1, 1]} : vector<16x1024xf32> to vector<1x32xf32>
    %45 = vector.extract_strided_slice %4 {offsets = [10, 0], sizes = [1, 32], strides = [1, 1]} : vector<16x1024xf32> to vector<1x32xf32>
    %46 = vector.extract_strided_slice %4 {offsets = [4, 0], sizes = [1, 32], strides = [1, 1]} : vector<16x1024xf32> to vector<1x32xf32>
    %47 = vector.extract_strided_slice %4 {offsets = [6, 0], sizes = [1, 32], strides = [1, 1]} : vector<16x1024xf32> to vector<1x32xf32>
    %cst_16 = arith.constant dense<0.000000e+00> : vector<8xf32>
    %48 = vector.multi_reduction <add>, %13, %cst_16 [1] : vector<8x32xf32> to vector<8xf32>
    %49 = vector.shape_cast %48 : vector<8xf32> to vector<8x1xf32>
    %cst_17 = arith.constant 3.200000e+01 : f32
    %50 = vector.broadcast %cst_17 : f32 to vector<8x1xf32>
    %51 = arith.divf %49, %50 : vector<8x1xf32>
    %52 = vector.broadcast %51 : vector<8x1xf32> to vector<8x32xf32>
    %53 = arith.subf %13, %52 : vector<8x32xf32>
    %54 = arith.mulf %53, %53 : vector<8x32xf32>
    %cst_18 = arith.constant dense<0.000000e+00> : vector<8xf32>
    %55 = vector.multi_reduction <add>, %54, %cst_18 [1] : vector<8x32xf32> to vector<8xf32>
    %56 = vector.shape_cast %55 : vector<8xf32> to vector<8x1xf32>
    %cst_19 = arith.constant 3.200000e+01 : f32
    %57 = vector.broadcast %cst_19 : f32 to vector<8x1xf32>
    %58 = arith.divf %56, %57 : vector<8x1xf32>
    %59 = vector.broadcast %51 : vector<8x1xf32> to vector<8x32xf32>
    %60 = arith.subf %13, %59 : vector<8x32xf32>
    %cst_20 = arith.constant 9.99999997E-7 : f32
    %61 = vector.broadcast %cst_20 : f32 to vector<8x1xf32>
    %62 = arith.addf %58, %61 : vector<8x1xf32>
    %63 = math.rsqrt %62 : vector<8x1xf32>
    %64 = vector.broadcast %63 : vector<8x1xf32> to vector<8x32xf32>
    %65 = arith.mulf %60, %64 : vector<8x32xf32>
    %66 = vector.broadcast %44 : vector<1x32xf32> to vector<8x32xf32>
    %67 = arith.mulf %65, %66 : vector<8x32xf32>
    %68 = vector.broadcast %45 : vector<1x32xf32> to vector<8x32xf32>
    %69 = arith.addf %67, %68 : vector<8x32xf32>
    %cst_21 = arith.constant 1.000000e+00 : f32
    %70 = vector.broadcast %cst_21 : f32 to vector<8x32xf32>
    %71 = arith.addf %70, %42 : vector<8x32xf32>
    %72 = arith.mulf %69, %71 : vector<8x32xf32>
    %73 = arith.addf %72, %41 : vector<8x32xf32>
    %c544 = arith.constant 544 : index
    %c0_22 = arith.constant 0 : index
    %74 = vector.load %arg2[%c544, %c0_22] : memref<672x32xf32, #tpu.memory_space<vmem>>, vector<32x32xf32>
    %cst_23 = arith.constant dense<0.000000e+00> : vector<8x32xf32>
    %75 = tpu.matmul %73, %74, %cst_23 {dimension_numbers = #tpu.dot_dimension_numbers<[1], [0], [0], [1], [0, 0, 1, 1], [], []>} : vector<8x32xf32>, vector<32x32xf32>, vector<8x32xf32> -> vector<8x32xf32>
    %76 = vector.broadcast %46 : vector<1x32xf32> to vector<8x32xf32>
    %77 = arith.addf %75, %76 : vector<8x32xf32>
    %78 = arith.negf %77 : vector<8x32xf32>
    %79 = math.exp %78 : vector<8x32xf32>
    %cst_24 = arith.constant 1.000000e+00 : f32
    %80 = vector.broadcast %cst_24 : f32 to vector<8x32xf32>
    %81 = arith.addf %80, %79 : vector<8x32xf32>
    %82 = arith.divf %80, %81 : vector<8x32xf32>
    %83 = arith.mulf %77, %82 : vector<8x32xf32>
    %c576 = arith.constant 576 : index
    %c0_25 = arith.constant 0 : index
    %84 = vector.load %arg2[%c576, %c0_25] : memref<672x32xf32, #tpu.memory_space<vmem>>, vector<32x32xf32>
    %cst_26 = arith.constant dense<0.000000e+00> : vector<8x32xf32>
    %85 = tpu.matmul %83, %84, %cst_26 {dimension_numbers = #tpu.dot_dimension_numbers<[1], [0], [0], [1], [0, 0, 1, 1], [], []>} : vector<8x32xf32>, vector<32x32xf32>, vector<8x32xf32> -> vector<8x32xf32>
    %86 = vector.broadcast %47 : vector<1x32xf32> to vector<8x32xf32>
    %87 = arith.addf %85, %86 : vector<8x32xf32>
    %88 = arith.mulf %43, %87 : vector<8x32xf32>
    %89 = arith.addf %13, %88 : vector<8x32xf32>
    %90 = vector.extract_strided_slice %40 {offsets = [0, 384], sizes = [8, 32], strides = [1, 1]} : vector<8x1024xf32> to vector<8x32xf32>
    %91 = vector.extract_strided_slice %40 {offsets = [0, 512], sizes = [8, 32], strides = [1, 1]} : vector<8x1024xf32> to vector<8x32xf32>
    %92 = vector.extract_strided_slice %40 {offsets = [0, 640], sizes = [8, 32], strides = [1, 1]} : vector<8x1024xf32> to vector<8x32xf32>
    %93 = vector.extract_strided_slice %4 {offsets = [9, 0], sizes = [1, 32], strides = [1, 1]} : vector<16x1024xf32> to vector<1x32xf32>
    %94 = vector.extract_strided_slice %4 {offsets = [11, 0], sizes = [1, 32], strides = [1, 1]} : vector<16x1024xf32> to vector<1x32xf32>
    %95 = vector.extract_strided_slice %4 {offsets = [5, 0], sizes = [1, 32], strides = [1, 1]} : vector<16x1024xf32> to vector<1x32xf32>
    %96 = vector.extract_strided_slice %4 {offsets = [7, 0], sizes = [1, 32], strides = [1, 1]} : vector<16x1024xf32> to vector<1x32xf32>
    %cst_27 = arith.constant dense<0.000000e+00> : vector<8xf32>
    %97 = vector.multi_reduction <add>, %89, %cst_27 [1] : vector<8x32xf32> to vector<8xf32>
    %98 = vector.shape_cast %97 : vector<8xf32> to vector<8x1xf32>
    %cst_28 = arith.constant 3.200000e+01 : f32
    %99 = vector.broadcast %cst_28 : f32 to vector<8x1xf32>
    %100 = arith.divf %98, %99 : vector<8x1xf32>
    %101 = vector.broadcast %100 : vector<8x1xf32> to vector<8x32xf32>
    %102 = arith.subf %89, %101 : vector<8x32xf32>
    %103 = arith.mulf %102, %102 : vector<8x32xf32>
    %cst_29 = arith.constant dense<0.000000e+00> : vector<8xf32>
    %104 = vector.multi_reduction <add>, %103, %cst_29 [1] : vector<8x32xf32> to vector<8xf32>
    %105 = vector.shape_cast %104 : vector<8xf32> to vector<8x1xf32>
    %cst_30 = arith.constant 3.200000e+01 : f32
    %106 = vector.broadcast %cst_30 : f32 to vector<8x1xf32>
    %107 = arith.divf %105, %106 : vector<8x1xf32>
    %108 = vector.broadcast %100 : vector<8x1xf32> to vector<8x32xf32>
    %109 = arith.subf %89, %108 : vector<8x32xf32>
    %cst_31 = arith.constant 9.99999997E-7 : f32
    %110 = vector.broadcast %cst_31 : f32 to vector<8x1xf32>
    %111 = arith.addf %107, %110 : vector<8x1xf32>
    %112 = math.rsqrt %111 : vector<8x1xf32>
    %113 = vector.broadcast %112 : vector<8x1xf32> to vector<8x32xf32>
    %114 = arith.mulf %109, %113 : vector<8x32xf32>
    %115 = vector.broadcast %93 : vector<1x32xf32> to vector<8x32xf32>
    %116 = arith.mulf %114, %115 : vector<8x32xf32>
    %117 = vector.broadcast %94 : vector<1x32xf32> to vector<8x32xf32>
    %118 = arith.addf %116, %117 : vector<8x32xf32>
    %cst_32 = arith.constant 1.000000e+00 : f32
    %119 = vector.broadcast %cst_32 : f32 to vector<8x32xf32>
    %120 = arith.addf %119, %91 : vector<8x32xf32>
    %121 = arith.mulf %118, %120 : vector<8x32xf32>
    %122 = arith.addf %121, %90 : vector<8x32xf32>
    %c608 = arith.constant 608 : index
    %c0_33 = arith.constant 0 : index
    %123 = vector.load %arg2[%c608, %c0_33] : memref<672x32xf32, #tpu.memory_space<vmem>>, vector<32x32xf32>
    %cst_34 = arith.constant dense<0.000000e+00> : vector<8x32xf32>
    %124 = tpu.matmul %122, %123, %cst_34 {dimension_numbers = #tpu.dot_dimension_numbers<[1], [0], [0], [1], [0, 0, 1, 1], [], []>} : vector<8x32xf32>, vector<32x32xf32>, vector<8x32xf32> -> vector<8x32xf32>
    %125 = vector.broadcast %95 : vector<1x32xf32> to vector<8x32xf32>
    %126 = arith.addf %124, %125 : vector<8x32xf32>
    %127 = arith.negf %126 : vector<8x32xf32>
    %128 = math.exp %127 : vector<8x32xf32>
    %cst_35 = arith.constant 1.000000e+00 : f32
    %129 = vector.broadcast %cst_35 : f32 to vector<8x32xf32>
    %130 = arith.addf %129, %128 : vector<8x32xf32>
    %131 = arith.divf %129, %130 : vector<8x32xf32>
    %132 = arith.mulf %126, %131 : vector<8x32xf32>
    %c640 = arith.constant 640 : index
    %c0_36 = arith.constant 0 : index
    %133 = vector.load %arg2[%c640, %c0_36] : memref<672x32xf32, #tpu.memory_space<vmem>>, vector<32x32xf32>
    %cst_37 = arith.constant dense<0.000000e+00> : vector<8x32xf32>
    %134 = tpu.matmul %132, %133, %cst_37 {dimension_numbers = #tpu.dot_dimension_numbers<[1], [0], [0], [1], [0, 0, 1, 1], [], []>} : vector<8x32xf32>, vector<32x32xf32>, vector<8x32xf32> -> vector<8x32xf32>
    %135 = vector.broadcast %96 : vector<1x32xf32> to vector<8x32xf32>
    %136 = arith.addf %134, %135 : vector<8x32xf32>
    %137 = arith.mulf %92, %136 : vector<8x32xf32>
    %138 = arith.addf %89, %137 : vector<8x32xf32>
    %139 = vector.extract_strided_slice %40 {offsets = [0, 768], sizes = [8, 32], strides = [1, 1]} : vector<8x1024xf32> to vector<8x32xf32>
    %140 = vector.extract_strided_slice %40 {offsets = [0, 896], sizes = [8, 32], strides = [1, 1]} : vector<8x1024xf32> to vector<8x32xf32>
    %cst_38 = arith.constant dense<0.000000e+00> : vector<8xf32>
    %141 = vector.multi_reduction <add>, %138, %cst_38 [1] : vector<8x32xf32> to vector<8xf32>
    %142 = vector.shape_cast %141 : vector<8xf32> to vector<8x1xf32>
    %cst_39 = arith.constant 3.200000e+01 : f32
    %143 = vector.broadcast %cst_39 : f32 to vector<8x1xf32>
    %144 = arith.divf %142, %143 : vector<8x1xf32>
    %145 = vector.broadcast %144 : vector<8x1xf32> to vector<8x32xf32>
    %146 = arith.subf %138, %145 : vector<8x32xf32>
    %147 = arith.mulf %146, %146 : vector<8x32xf32>
    %cst_40 = arith.constant dense<0.000000e+00> : vector<8xf32>
    %148 = vector.multi_reduction <add>, %147, %cst_40 [1] : vector<8x32xf32> to vector<8xf32>
    %149 = vector.shape_cast %148 : vector<8xf32> to vector<8x1xf32>
    %cst_41 = arith.constant 3.200000e+01 : f32
    %150 = vector.broadcast %cst_41 : f32 to vector<8x1xf32>
    %151 = arith.divf %149, %150 : vector<8x1xf32>
    %152 = vector.broadcast %144 : vector<8x1xf32> to vector<8x32xf32>
    %153 = arith.subf %138, %152 : vector<8x32xf32>
    %cst_42 = arith.constant 9.99999997E-7 : f32
    %154 = vector.broadcast %cst_42 : f32 to vector<8x1xf32>
    %155 = arith.addf %151, %154 : vector<8x1xf32>
    %156 = math.rsqrt %155 : vector<8x1xf32>
    %157 = vector.broadcast %156 : vector<8x1xf32> to vector<8x32xf32>
    %158 = arith.mulf %153, %157 : vector<8x32xf32>
    %cst_43 = arith.constant 1.000000e+00 : f32
    %159 = vector.broadcast %cst_43 : f32 to vector<8x32xf32>
    %160 = arith.addf %159, %140 : vector<8x32xf32>
    %161 = arith.mulf %158, %160 : vector<8x32xf32>
    %162 = arith.addf %161, %139 : vector<8x32xf32>
    %c0_44 = arith.constant 0 : index
    %c1024 = arith.constant 1024 : index
    %163 = vector.load %arg3[%c0_44, %c1024] : memref<32x1152xf32, #tpu.memory_space<vmem>>, vector<32x128xf32>
    %cst_45 = arith.constant dense<0.000000e+00> : vector<8x128xf32>
    %164 = tpu.matmul %162, %163, %cst_45 {dimension_numbers = #tpu.dot_dimension_numbers<[1], [0], [0], [1], [0, 0, 1, 1], [], []>} : vector<8x32xf32>, vector<32x128xf32>, vector<8x128xf32> -> vector<8x128xf32>
    %165 = vector.broadcast %9 : vector<1x128xf32> to vector<8x128xf32>
    %166 = arith.addf %164, %165 : vector<8x128xf32>
    %c0_46 = arith.constant 0 : index
    %c0_47 = arith.constant 0 : index
    %167 = vector.load %arg5[%c0_46, %c0_47] : memref<8x128xf32, #tpu.memory_space<vmem>>, vector<8x128xf32>
    tpu.vector_store %arg5[%c0_46, %c0_47], %166 {strides = array<i32>} : memref<8x128xf32, #tpu.memory_space<vmem>>, vector<8x128xf32>,
    return
  }
  func.func @transform_0(%arg0: i32) -> (i32, i32) {
    %c0_i32 = arith.constant 0 : i32
    %c0_i32_0 = arith.constant 0 : i32
    return %arg0, %c0_i32 : i32, i32
  }
  func.func @transform_1(%arg0: i32) -> (i32, i32) {
    %c0_i32 = arith.constant 0 : i32
    %c0_i32_0 = arith.constant 0 : i32
    %c0_i32_1 = arith.constant 0 : i32
    return %c0_i32, %c0_i32_0 : i32, i32
  }
  func.func @transform_2(%arg0: i32) -> (i32, i32) {
    %c0_i32 = arith.constant 0 : i32
    %c0_i32_0 = arith.constant 0 : i32
    %c0_i32_1 = arith.constant 0 : i32
    return %c0_i32, %c0_i32_0 : i32, i32
  }
  func.func @transform_3(%arg0: i32) -> (i32, i32) {
    %c0_i32 = arith.constant 0 : i32
    %c0_i32_0 = arith.constant 0 : i32
    %c0_i32_1 = arith.constant 0 : i32
    return %c0_i32, %c0_i32_0 : i32, i32
  }
  func.func @transform_4(%arg0: i32) -> (i32, i32) {
    %c0_i32 = arith.constant 0 : i32
    %c0_i32_0 = arith.constant 0 : i32
    return %arg0, %c0_i32 : i32, i32
  }
}

</mosaic_0001>

<llo_original>
// kernel: simple_mlp_adaln.1
$region0: #{simple_mlp_adaln.1}
  #allocation0 [shape = 'u32[]', space=smem, size = 0x4, offset = 0x4, fixed_abs, tag = 'smem constant byte address 0x4 - core index']
  #allocation1 [shape = 'u32[144,128]{1,0:T(1,128)}', space=vmem, size = 0x12000, scoped, tag = 'internal scratch']
  %s0 = inlined_call_operand.vmem [shape: f32[8,512], index: 0, kind: input, shape index: {}]
  %s1 = inlined_call_operand.vmem [shape: f32[672,32], index: 1, kind: input, shape index: {}]
  %s2 = inlined_call_operand.vmem [shape: f32[32,1152], index: 2, kind: input, shape index: {}]
  %s3 = inlined_call_operand.vmem [shape: f32[16,1024], index: 3, kind: input, shape index: {}]
  %s4 = inlined_call_operand.hbm [shape: f32[8,128], index: 4, kind: output, shape index: {}]
  %s5 = sld [smem:[#allocation0]]
  $region26: #{simple_mlp_adaln.1} parent=0
    _
  %s7 = ssub.s32 1, %s5
  %s8 = scalar_select 0, %s7, %s5
  $region1: #{simple_mlp_adaln.1} parent=0
    #allocation2 [shape = 'u8[4096]{0}', space=vmem, size = 0x1000, scoped, tag = 'output window, operand 0, single buffered']
    #allocation3 [shape = 's32[1]{0}', space=sflag, size = 0x4, scoped, tag = 'scoped memory for simple_mlp_adaln.1']
    %9 = vsyncpa [#allocation3], 0
    // Predicated region
    $region2: #{simple_mlp_adaln.1} parent=1 // pred_check
      _
    $region3: #{simple_mlp_adaln.1} parent=1 // pred_check_branch
      %11 = sbr.rel (0) target = $region5
    $region4: #{simple_mlp_adaln.1} parent=1 // pred_region
      _
    $region5: #{simple_mlp_adaln.1} parent=1 // pred_fallthru
      _
    // Predicated region
    $region6: #{simple_mlp_adaln.1} parent=1 // pred_check
      _
    $region7: #{simple_mlp_adaln.1} parent=1 // pred_check_branch
      %13 = sbr.rel (0) target = $region9
    $region8: #{simple_mlp_adaln.1} parent=1 // pred_region
      _
    $region9: #{simple_mlp_adaln.1} parent=1 // pred_fallthru
      _
    // Predicated region
    $region10: #{simple_mlp_adaln.1} parent=1 // pred_check
      _
    $region11: #{simple_mlp_adaln.1} parent=1 // pred_check_branch
      %15 = sbr.rel (0) target = $region13
    $region12: #{simple_mlp_adaln.1} parent=1 // pred_region
      _
    $region13: #{simple_mlp_adaln.1} parent=1 // pred_fallthru
      _
    // Predicated region
    $region14: #{simple_mlp_adaln.1} parent=1 // pred_check
      _
    $region15: #{simple_mlp_adaln.1} parent=1 // pred_check_branch
      %17 = sbr.rel (0) target = $region17
    $region16: #{simple_mlp_adaln.1} parent=1 // pred_region
      _
    $region17: #{simple_mlp_adaln.1} parent=1 // pred_fallthru
      _
    %v18 = vld [vmem:[%s0] sm:$0xff]
    %v19 = vld [vmem:[%s0 + $0x8] sm:$0xff]
    %v20 = vld [vmem:[%s0 + $0x10] sm:$0xff]
    %v21 = vld [vmem:[%s0 + $0x18] sm:$0xff]
    %v22 = vld [vmem:[%s3] sm:$0xff]
    %v23 = vld [vmem:[%s3 + $0x8] sm:$0xff]
    %v24 = vld [vmem:[%s3 + $0x10] sm:$0xff]
    %v25 = vld [vmem:[%s3 + $0x18] sm:$0xff]
    %v26 = vld [vmem:[%s3 + $0x20] sm:$0xff]
    %v27 = vld [vmem:[%s3 + $0x28] sm:$0xff]
    %v28 = vld [vmem:[%s3 + $0x30] sm:$0xff]
    %v29 = vld [vmem:[%s3 + $0x38] sm:$0xff]
    %v30 = vld [vmem:[%s3 + $0x40] sm:$0xff]
    %v31 = vld [vmem:[%s1] sm:$0xff]
    %v32 = vld [vmem:[%s1 + $0x8] sm:$0xff]
    %v33 = vld [vmem:[%s1 + $0x10] sm:$0xff]
    %v34 = vld [vmem:[%s1 + $0x18] sm:$0xff]
    %v35 = vld [vmem:[%s1 + $0x20] sm:$0xff]
    %v36 = vld [vmem:[%s1 + $0x28] sm:$0xff]
    %v37 = vld [vmem:[%s1 + $0x30] sm:$0xff]
    %v38 = vld [vmem:[%s1 + $0x38] sm:$0xff]
    %v39 = vld [vmem:[%s1 + $0x40] sm:$0xff]
    %v40 = vld [vmem:[%s1 + $0x48] sm:$0xff]
    %v41 = vld [vmem:[%s1 + $0x50] sm:$0xff]
    %v42 = vld [vmem:[%s1 + $0x58] sm:$0xff]
    %v43 = vld [vmem:[%s1 + $0x60] sm:$0xff]
    %v44 = vld [vmem:[%s1 + $0x68] sm:$0xff]
    %v45 = vld [vmem:[%s1 + $0x70] sm:$0xff]
    %v46 = vld [vmem:[%s1 + $0x78] sm:$0xff]
    %v47 = vlaneseq
    %v48 = vshrl.u32 %v47, 7
    %v49 = vsub.s32 0, %v48
    %v50 = vrot.slane %v22, %v49
    %51 = vmatprep.subr.mxu0 0.0
    %52 = vmatpush1.msra.mxu0 %v31
    %53 = vmatprep.subr.mxu0 0.0
    %54 = vmatpush1.msra.mxu0 %v32
    %55 = vmatprep.subr.mxu0 0.0
    %56 = vmatpush1.msra.mxu0 %v33
    %57 = vmatprep.subr.mxu0 0.0
    %58 = vmatpush1.msra.mxu0 %v34
    %59 = vmatprep.subr.mxu0 0.0
    %60 = vmatpush1.msra.mxu0 %v35
    %61 = vmatprep.subr.mxu0 0.0
    %62 = vmatpush1.msra.mxu0 %v36
    %63 = vmatprep.subr.mxu0 0.0
    %64 = vmatpush1.msra.mxu0 %v37
    %65 = vmatprep.subr.mxu0 0.0
    %66 = vmatpush1.msra.mxu0 %v38
    %67 = vmatprep.subr.mxu0 0.0
    %68 = vmatpush1.msra.mxu0 %v39
    %69 = vmatprep.subr.mxu0 0.0
    %70 = vmatpush1.msra.mxu0 %v40
    %71 = vmatprep.subr.mxu0 0.0
    %72 = vmatpush1.msra.mxu0 %v41
    %73 = vmatprep.subr.mxu0 0.0
    %74 = vmatpush1.msra.mxu0 %v42
    %75 = vmatprep.subr.mxu0 0.0
    %76 = vmatpush1.msra.mxu0 %v43
    %77 = vmatprep.subr.mxu0 0.0
    %78 = vmatpush1.msra.mxu0 %v44
    %79 = vmatprep.subr.mxu0 0.0
    %80 = vmatpush1.msra.mxu0 %v45
    %81 = vmatprep.subr.mxu0 0.0
    %82 = vmatpush1.msra.mxu0 %v46
    %83 = vmatprep.subr.mxu0 0.0
    %84 = vmatpush1.msra.mxu0 0.0
    %85 = vmatprep.subr.mxu0 0.0
    %86 = vmatpush1.msra.mxu0 0.0
    %87 = vmatprep.subr.mxu0 0.0
    %88 = vmatpush1.msra.mxu0 0.0
    %89 = vmatprep.subr.mxu0 0.0
    %90 = vmatpush1.msra.mxu0 0.0
    %91 = vmatprep.subr.mxu0 0.0
    %92 = vmatpush1.msra.mxu0 0.0
    %93 = vmatprep.subr.mxu0 0.0
    %94 = vmatpush1.msra.mxu0 0.0
    %95 = vmatprep.subr.mxu0 0.0
    %96 = vmatpush1.msra.mxu0 0.0
    %97 = vmatprep.subr.mxu0 0.0
    %98 = vmatpush1.msra.mxu0 0.0
    %99 = vmatprep.subr.mxu0 0.0
    %100 = vmatpush1.msra.mxu0 0.0
    %101 = vmatprep.subr.mxu0 0.0
    %102 = vmatpush1.msra.mxu0 0.0
    %103 = vmatprep.subr.mxu0 0.0
    %104 = vmatpush1.msra.mxu0 0.0
    %105 = vmatprep.subr.mxu0 0.0
    %106 = vmatpush1.msra.mxu0 0.0
    %107 = vmatprep.subr.mxu0 0.0
    %108 = vmatpush1.msra.mxu0 0.0
    %109 = vmatprep.subr.mxu0 0.0
    %110 = vmatpush1.msra.mxu0 0.0
    %111 = vmatprep.subr.mxu0 0.0
    %112 = vmatpush1.msra.mxu0 0.0
    %113 = vmatprep.subr.mxu0 0.0
    %114 = vmatpush1.msra.mxu0 0.0
    %115 = vmatprep.mubr.f32.mxu0 0.0
    %116 = vmatmul.mubr.f32.gmra.mrb[0].mxu0 %v20
    %v117 = vpop.f32.mrb[0].mxu0
    %v118 = vadd.f32 %v50, %v117
    %v119 = vpop.f32.mrb[0].mxu0
    %120 = vdwg.mxu0
    %v121 = vld [vmem:[%s1 + $0x80] sm:$0xff]
    %v122 = vld [vmem:[%s1 + $0x88] sm:$0xff]
    %v123 = vld [vmem:[%s1 + $0x90] sm:$0xff]
    %v124 = vld [vmem:[%s1 + $0x98] sm:$0xff]
    %v125 = vld [vmem:[%s1 + $0xa0] sm:$0xff]
    %v126 = vld [vmem:[%s1 + $0xa8] sm:$0xff]
    %v127 = vld [vmem:[%s1 + $0xb0] sm:$0xff]
    %v128 = vld [vmem:[%s1 + $0xb8] sm:$0xff]
    %v129 = vld [vmem:[%s1 + $0xc0] sm:$0xff]
    %v130 = vld [vmem:[%s1 + $0xc8] sm:$0xff]
    %v131 = vld [vmem:[%s1 + $0xd0] sm:$0xff]
    %v132 = vld [vmem:[%s1 + $0xd8] sm:$0xff]
    %v133 = vld [vmem:[%s1 + $0xe0] sm:$0xff]
    %v134 = vld [vmem:[%s1 + $0xe8] sm:$0xff]
    %v135 = vld [vmem:[%s1 + $0xf0] sm:$0xff]
    %v136 = vld [vmem:[%s1 + $0xf8] sm:$0xff]
    %v137 = vld [vmem:[%s1 + $0x100] sm:$0xff]
    %v138 = vld [vmem:[%s1 + $0x108] sm:$0xff]
    %v139 = vld [vmem:[%s1 + $0x110] sm:$0xff]
    %v140 = vld [vmem:[%s1 + $0x118] sm:$0xff]
    %v141 = vld [vmem:[%s1 + $0x120] sm:$0xff]
    %v142 = vld [vmem:[%s1 + $0x128] sm:$0xff]
    %v143 = vld [vmem:[%s1 + $0x130] sm:$0xff]
    %v144 = vld [vmem:[%s1 + $0x138] sm:$0xff]
    %v145 = vld [vmem:[%s1 + $0x140] sm:$0xff]
    %v146 = vld [vmem:[%s1 + $0x148] sm:$0xff]
    %v147 = vld [vmem:[%s1 + $0x150] sm:$0xff]
    %v148 = vld [vmem:[%s1 + $0x158] sm:$0xff]
    %v149 = vld [vmem:[%s1 + $0x160] sm:$0xff]
    %v150 = vld [vmem:[%s1 + $0x168] sm:$0xff]
    %v151 = vld [vmem:[%s1 + $0x170] sm:$0xff]
    %v152 = vld [vmem:[%s1 + $0x178] sm:$0xff]
    %v153 = vlaneseq
    %v154 = vshrl.u32 %v153, 7
    %v155 = vsub.s32 1, %v154
    %v156 = vrot.slane %v22, %v155
    %157 = vmatprep.subr.mxu0 0.0
    %158 = vmatpush1.msra.mxu0 %v121
    %159 = vmatprep.subr.mxu0 0.0
    %160 = vmatpush1.msra.mxu0 %v122
    %161 = vmatprep.subr.mxu0 0.0
    %162 = vmatpush1.msra.mxu0 %v123
    %163 = vmatprep.subr.mxu0 0.0
    %164 = vmatpush1.msra.mxu0 %v124
    %165 = vmatprep.subr.mxu0 0.0
    %166 = vmatpush1.msra.mxu0 %v125
    %167 = vmatprep.subr.mxu0 0.0
    %168 = vmatpush1.msra.mxu0 %v126
    %169 = vmatprep.subr.mxu0 0.0
    %170 = vmatpush1.msra.mxu0 %v127
    %171 = vmatprep.subr.mxu0 0.0
    %172 = vmatpush1.msra.mxu0 %v128
    %173 = vmatprep.subr.mxu0 0.0
    %174 = vmatpush1.msra.mxu0 %v129
    %175 = vmatprep.subr.mxu0 0.0
    %176 = vmatpush1.msra.mxu0 %v130
    %177 = vmatprep.subr.mxu0 0.0
    %178 = vmatpush1.msra.mxu0 %v131
    %179 = vmatprep.subr.mxu0 0.0
    %180 = vmatpush1.msra.mxu0 %v132
    %181 = vmatprep.subr.mxu0 0.0
    %182 = vmatpush1.msra.mxu0 %v133
    %183 = vmatprep.subr.mxu0 0.0
    %184 = vmatpush1.msra.mxu0 %v134
    %185 = vmatprep.subr.mxu0 0.0
    %186 = vmatpush1.msra.mxu0 %v135
    %187 = vmatprep.subr.mxu0 0.0
    %188 = vmatpush1.msra.mxu0 %v136
    %189 = vmatprep.subr.mxu0 0.0
    %190 = vmatpush1.msra.mxu0 %v137
    %191 = vmatprep.subr.mxu0 0.0
    %192 = vmatpush1.msra.mxu0 %v138
    %193 = vmatprep.subr.mxu0 0.0
    %194 = vmatpush1.msra.mxu0 %v139
    %195 = vmatprep.subr.mxu0 0.0
    %196 = vmatpush1.msra.mxu0 %v140
    %197 = vmatprep.subr.mxu0 0.0
    %198 = vmatpush1.msra.mxu0 %v141
    %199 = vmatprep.subr.mxu0 0.0
    %200 = vmatpush1.msra.mxu0 %v142
    %201 = vmatprep.subr.mxu0 0.0
    %202 = vmatpush1.msra.mxu0 %v143
    %203 = vmatprep.subr.mxu0 0.0
    %204 = vmatpush1.msra.mxu0 %v144
    %205 = vmatprep.subr.mxu0 0.0
    %206 = vmatpush1.msra.mxu0 %v145
    %207 = vmatprep.subr.mxu0 0.0
    %208 = vmatpush1.msra.mxu0 %v146
    %209 = vmatprep.subr.mxu0 0.0
    %210 = vmatpush1.msra.mxu0 %v147
    %211 = vmatprep.subr.mxu0 0.0
    %212 = vmatpush1.msra.mxu0 %v148
    %213 = vmatprep.subr.mxu0 0.0
    %214 = vmatpush1.msra.mxu0 %v149
    %215 = vmatprep.subr.mxu0 0.0
    %216 = vmatpush1.msra.mxu0 %v150
    %217 = vmatprep.subr.mxu0 0.0
    %218 = vmatpush1.msra.mxu0 %v151
    %219 = vmatprep.subr.mxu0 0.0
    %220 = vmatpush1.msra.mxu0 %v152
    %221 = vmatprep.mubr.f32.mxu0 %v19
    %222 = vmatmul.mubr.f32.gmra.mrb[0].mxu0 %v18
    %v223 = vpop.f32.mrb[0].mxu0
    %v224 = vadd.f32 %v156, %v223
    %v225 = vpop.f32.mrb[0].mxu0
    %226 = vdwg.mxu0
    %v227 = vxor.u32 %v224, 2147483648
    %v228 = vmul.f32 %v227, 1.442695
    %v229 = vpow.pop %v228
    %v230 = vadd.f32 %v229, 1.0
    %v231 = vrcp.pop %v230
    %v232 = vmul.f32 1.0, %v231
    %v233 = vmul.f32 %v224, %v232
    %v234 = vld [vmem:[%s1 + $0x180] sm:$0xff]
    %v235 = vld [vmem:[%s1 + $0x188] sm:$0xff]
    %v236 = vld [vmem:[%s1 + $0x190] sm:$0xff]
    %v237 = vld [vmem:[%s1 + $0x198] sm:$0xff]
    %v238 = vld [vmem:[%s1 + $0x1a0] sm:$0xff]
    %v239 = vld [vmem:[%s1 + $0x1a8] sm:$0xff]
    %v240 = vld [vmem:[%s1 + $0x1b0] sm:$0xff]
    %v241 = vld [vmem:[%s1 + $0x1b8] sm:$0xff]
    %v242 = vld [vmem:[%s1 + $0x1c0] sm:$0xff]
    %v243 = vld [vmem:[%s1 + $0x1c8] sm:$0xff]
    %v244 = vld [vmem:[%s1 + $0x1d0] sm:$0xff]
    %v245 = vld [vmem:[%s1 + $0x1d8] sm:$0xff]
    %v246 = vld [vmem:[%s1 + $0x1e0] sm:$0xff]
    %v247 = vld [vmem:[%s1 + $0x1e8] sm:$0xff]
    %v248 = vld [vmem:[%s1 + $0x1f0] sm:$0xff]
    %v249 = vld [vmem:[%s1 + $0x1f8] sm:$0xff]
    %v250 = vld [vmem:[%s1 + $0x200] sm:$0xff]
    %v251 = vld [vmem:[%s1 + $0x208] sm:$0xff]
    %v252 = vld [vmem:[%s1 + $0x210] sm:$0xff]
    %v253 = vld [vmem:[%s1 + $0x218] sm:$0xff]
    %254 = vmatprep.subr.mxu0 0.0
    %255 = vmatpush1.msra.mxu0 %v238
    %256 = vmatprep.subr.mxu0 0.0
    %257 = vmatpush1.msra.mxu0 %v239
    %258 = vmatprep.subr.mxu0 0.0
    %259 = vmatpush1.msra.mxu0 %v240
    %260 = vmatprep.subr.mxu0 0.0
    %261 = vmatpush1.msra.mxu0 %v241
    %262 = vmatprep.subr.mxu0 0.0
    %263 = vmatpush1.msra.mxu0 %v242
    %264 = vmatprep.subr.mxu0 0.0
    %265 = vmatpush1.msra.mxu0 %v243
    %266 = vmatprep.subr.mxu0 0.0
    %267 = vmatpush1.msra.mxu0 %v244
    %268 = vmatprep.subr.mxu0 0.0
    %269 = vmatpush1.msra.mxu0 %v245
    %270 = vmatprep.subr.mxu0 0.0
    %271 = vmatpush1.msra.mxu0 %v246
    %272 = vmatprep.subr.mxu0 0.0
    %273 = vmatpush1.msra.mxu0 %v247
    %274 = vmatprep.subr.mxu0 0.0
    %275 = vmatpush1.msra.mxu0 %v248
    %276 = vmatprep.subr.mxu0 0.0
    %277 = vmatpush1.msra.mxu0 %v249
    %278 = vmatprep.subr.mxu0 0.0
    %279 = vmatpush1.msra.mxu0 %v250
    %280 = vmatprep.subr.mxu0 0.0
    %281 = vmatpush1.msra.mxu0 %v251
    %282 = vmatprep.subr.mxu0 0.0
    %283 = vmatpush1.msra.mxu0 %v252
    %284 = vmatprep.subr.mxu0 0.0
    %285 = vmatpush1.msra.mxu0 %v253
    %286 = vmatprep.subr.mxu0 0.0
    %287 = vmatpush1.msra.mxu0 0.0
    %288 = vmatprep.subr.mxu0 0.0
    %289 = vmatpush1.msra.mxu0 0.0
    %290 = vmatprep.subr.mxu0 0.0
    %291 = vmatpush1.msra.mxu0 0.0
    %292 = vmatprep.subr.mxu0 0.0
    %293 = vmatpush1.msra.mxu0 0.0
    %294 = vmatprep.subr.mxu0 0.0
    %295 = vmatpush1.msra.mxu0 0.0
    %296 = vmatprep.subr.mxu0 0.0
    %297 = vmatpush1.msra.mxu0 0.0
    %298 = vmatprep.subr.mxu0 0.0
    %299 = vmatpush1.msra.mxu0 0.0
    %300 = vmatprep.subr.mxu0 0.0
    %301 = vmatpush1.msra.mxu0 0.0
    %302 = vmatprep.subr.mxu0 0.0
    %303 = vmatpush1.msra.mxu0 0.0
    %304 = vmatprep.subr.mxu0 0.0
    %305 = vmatpush1.msra.mxu0 0.0
    %306 = vmatprep.subr.mxu0 0.0
    %307 = vmatpush1.msra.mxu0 0.0
    %308 = vmatprep.subr.mxu0 0.0
    %309 = vmatpush1.msra.mxu0 0.0
    %310 = vmatprep.subr.mxu0 0.0
    %311 = vmatpush1.msra.mxu0 0.0
    %312 = vmatprep.subr.mxu0 0.0
    %313 = vmatpush1.msra.mxu0 0.0
    %314 = vmatprep.subr.mxu0 0.0
    %315 = vmatpush1.msra.mxu0 0.0
    %316 = vmatprep.subr.mxu0 0.0
    %317 = vmatpush1.msra.mxu0 0.0
    %318 = vmatprep.mubr.f32.mxu0 0.0
    %319 = vmatmul.mubr.f32.gmra.mrb[0].mxu0 %v21
    %v320 = vpop.f32.mrb[0].mxu0
    %v321 = vadd.f32 0.0, %v320
    %v322 = vpop.f32.mrb[0].mxu0
    %323 = vdwg.mxu0
    %vm324 = vcmask 261120
    %v326 = vsel %vm324, %v233, 0
    %328 = vmatprep.subr.mxu0 0.0
    %329 = vmatpush1.msra.mxu0 %v234
    %330 = vmatprep.subr.mxu0 0.0
    %331 = vmatpush1.msra.mxu0 %v235
    %332 = vmatprep.subr.mxu0 0.0
    %333 = vmatpush1.msra.mxu0 %v236
    %334 = vmatprep.subr.mxu0 0.0
    %335 = vmatpush1.msra.mxu0 %v237
    %336 = vmatprep.subr.mxu0 0.0
    %337 = vmatpush1.msra.mxu0 0.0
    %338 = vmatprep.subr.mxu0 0.0
    %339 = vmatpush1.msra.mxu0 0.0
    %340 = vmatprep.subr.mxu0 0.0
    %341 = vmatpush1.msra.mxu0 0.0
    %342 = vmatprep.subr.mxu0 0.0
    %343 = vmatpush1.msra.mxu0 0.0
    %344 = vmatprep.subr.mxu0 0.0
    %345 = vmatpush1.msra.mxu0 0.0
    %346 = vmatprep.subr.mxu0 0.0
    %347 = vmatpush1.msra.mxu0 0.0
    %348 = vmatprep.subr.mxu0 0.0
    %349 = vmatpush1.msra.mxu0 0.0
    %350 = vmatprep.subr.mxu0 0.0
    %351 = vmatpush1.msra.mxu0 0.0
    %352 = vmatprep.subr.mxu0 0.0
    %353 = vmatpush1.msra.mxu0 0.0
    %354 = vmatprep.subr.mxu0 0.0
    %355 = vmatpush1.msra.mxu0 0.0
    %356 = vmatprep.subr.mxu0 0.0
    %357 = vmatpush1.msra.mxu0 0.0
    %358 = vmatprep.subr.mxu0 0.0
    %359 = vmatpush1.msra.mxu0 0.0
    %360 = vmatprep.subr.mxu0 0.0
    %361 = vmatpush1.msra.mxu0 0.0
    %362 = vmatprep.subr.mxu0 0.0
    %363 = vmatpush1.msra.mxu0 0.0
    %364 = vmatprep.subr.mxu0 0.0
    %365 = vmatpush1.msra.mxu0 0.0
    %366 = vmatprep.subr.mxu0 0.0
    %367 = vmatpush1.msra.mxu0 0.0
    %368 = vmatprep.subr.mxu0 0.0
    %369 = vmatpush1.msra.mxu0 0.0
    %370 = vmatprep.subr.mxu0 0.0
    %371 = vmatpush1.msra.mxu0 0.0
    %372 = vmatprep.subr.mxu0 0.0
    %373 = vmatpush1.msra.mxu0 0.0
    %374 = vmatprep.subr.mxu0 0.0
    %375 = vmatpush1.msra.mxu0 0.0
    %376 = vmatprep.subr.mxu0 0.0
    %377 = vmatpush1.msra.mxu0 0.0
    %378 = vmatprep.subr.mxu0 0.0
    %379 = vmatpush1.msra.mxu0 0.0
    %380 = vmatprep.subr.mxu0 0.0
    %381 = vmatpush1.msra.mxu0 0.0
    %382 = vmatprep.subr.mxu0 0.0
    %383 = vmatpush1.msra.mxu0 0.0
    %384 = vmatprep.subr.mxu0 0.0
    %385 = vmatpush1.msra.mxu0 0.0
    %386 = vmatprep.subr.mxu0 0.0
    %387 = vmatpush1.msra.mxu0 0.0
    %388 = vmatprep.subr.mxu0 0.0
    %389 = vmatpush1.msra.mxu0 0.0
    %390 = vmatprep.subr.mxu0 0.0
    %391 = vmatpush1.msra.mxu0 0.0
    %392 = vmatprep.mubr.f32.mxu0 0.0
    %393 = vmatmul.mubr.f32.gmra.mrb[0].mxu0 %v326
    %v394 = vpop.f32.mrb[0].mxu0
    %v395 = vadd.f32 %v321, %v394
    %v396 = vpop.f32.mrb[0].mxu0
    %397 = vdwg.mxu0
    %v398 = vlaneseq
    %v399 = vshrl.u32 %v398, 7
    %v400 = vsub.s32 2, %v399
    %v401 = vrot.slane %v22, %v400
    %v402 = vadd.f32 %v395, %v401
    %v403 = vxor.u32 %v402, 2147483648
    %v404 = vmul.f32 %v403, 1.442695
    %v405 = vpow.pop %v404
    %v406 = vadd.f32 %v405, 1.0
    %v407 = vrcp.pop %v406
    %v408 = vmul.f32 1.0, %v407
    %v409 = vmul.f32 %v402, %v408
    %v410 = vld [vmem:[%s2] sm:$0xff]
    %v411 = vld [vmem:[%s2 + $0x8] sm:$0xff]
    %v412 = vld [vmem:[%s2 + $0x10] sm:$0xff]
    %v413 = vld [vmem:[%s2 + $0x18] sm:$0xff]
    %v414 = vld [vmem:[%s2 + $0x20] sm:$0xff]
    %v415 = vld [vmem:[%s2 + $0x28] sm:$0xff]
    %v416 = vld [vmem:[%s2 + $0x30] sm:$0xff]
    %v417 = vld [vmem:[%s2 + $0x38] sm:$0xff]
    %v418 = vld [vmem:[%s2 + $0x48] sm:$0xff]
    %v419 = vld [vmem:[%s2 + $0x50] sm:$0xff]
    %v420 = vld [vmem:[%s2 + $0x58] sm:$0xff]
    %v421 = vld [vmem:[%s2 + $0x60] sm:$0xff]
    %v422 = vld [vmem:[%s2 + $0x68] sm:$0xff]
    %v423 = vld [vmem:[%s2 + $0x70] sm:$0xff]
    %v424 = vld [vmem:[%s2 + $0x78] sm:$0xff]
    %v425 = vld [vmem:[%s2 + $0x80] sm:$0xff]
    %v426 = vld [vmem:[%s2 + $0x90] sm:$0xff]
    %v427 = vld [vmem:[%s2 + $0x98] sm:$0xff]
    %v428 = vld [vmem:[%s2 + $0xa0] sm:$0xff]
    %v429 = vld [vmem:[%s2 + $0xa8] sm:$0xff]
    %v430 = vld [vmem:[%s2 + $0xb0] sm:$0xff]
    %v431 = vld [vmem:[%s2 + $0xb8] sm:$0xff]
    %v432 = vld [vmem:[%s2 + $0xc0] sm:$0xff]
    %v433 = vld [vmem:[%s2 + $0xc8] sm:$0xff]
    %v434 = vld [vmem:[%s2 + $0xd8] sm:$0xff]
    %v435 = vld [vmem:[%s2 + $0xe0] sm:$0xff]
    %v436 = vld [vmem:[%s2 + $0xe8] sm:$0xff]
    %v437 = vld [vmem:[%s2 + $0xf0] sm:$0xff]
    %v438 = vld [vmem:[%s2 + $0xf8] sm:$0xff]
    %v439 = vld [vmem:[%s2 + $0x100] sm:$0xff]
    %v440 = vld [vmem:[%s2 + $0x108] sm:$0xff]
    %v441 = vld [vmem:[%s2 + $0x110] sm:$0xff]
    %v442 = vlaneseq
    %v443 = vshrl.u32 %v442, 7
    %v444 = vsub.s32 3, %v443
    %v445 = vrot.slane %v22, %v444
    %v446 = vlaneseq
    %v447 = vshrl.u32 %v446, 7
    %v448 = vsub.s32 3, %v447
    %v449 = vrot.slane %v23, %v448
    %v450 = vlaneseq
    %v451 = vshrl.u32 %v450, 7
    %v452 = vsub.s32 3, %v451
    %v453 = vrot.slane %v24, %v452
    %v454 = vlaneseq
    %v455 = vshrl.u32 %v454, 7
    %v456 = vsub.s32 3, %v455
    %v457 = vrot.slane %v25, %v456
    %v458 = vlaneseq
    %v459 = vshrl.u32 %v458, 7
    %v460 = vsub.s32 3, %v459
    %v461 = vrot.slane %v26, %v460
    %v462 = vlaneseq
    %v463 = vshrl.u32 %v462, 7
    %v464 = vsub.s32 3, %v463
    %v465 = vrot.slane %v27, %v464
    %v466 = vlaneseq
    %v467 = vshrl.u32 %v466, 7
    %v468 = vsub.s32 3, %v467
    %v469 = vrot.slane %v28, %v468
    %v470 = vlaneseq
    %v471 = vshrl.u32 %v470, 7
    %v472 = vsub.s32 3, %v471
    %v473 = vrot.slane %v29, %v472
    %v475 = vsel %vm324, %v409, 0
    %477 = vmatprep.subr.mxu0 %v411
    %478 = vmatpush1.msra.mxu0 %v410
    %479 = vmatprep.subr.mxu0 %v419
    %480 = vmatpush1.msra.mxu0 %v418
    %481 = vmatprep.subr.mxu0 %v427
    %482 = vmatpush1.msra.mxu0 %v426
    %483 = vmatprep.subr.mxu0 %v435
    %484 = vmatpush1.msra.mxu0 %v434
    %485 = vmatprep.subr.mxu0 0.0
    %486 = vmatpush1.msra.mxu0 0.0
    %487 = vmatprep.subr.mxu0 0.0
    %488 = vmatpush1.msra.mxu0 0.0
    %489 = vmatprep.subr.mxu0 0.0
    %490 = vmatpush1.msra.mxu0 0.0
    %491 = vmatprep.subr.mxu0 0.0
    %492 = vmatpush1.msra.mxu0 0.0
    %493 = vmatprep.subr.mxu0 0.0
    %494 = vmatpush1.msra.mxu0 0.0
    %495 = vmatprep.subr.mxu0 0.0
    %496 = vmatpush1.msra.mxu0 0.0
    %497 = vmatprep.subr.mxu0 0.0
    %498 = vmatpush1.msra.mxu0 0.0
    %499 = vmatprep.subr.mxu0 0.0
    %500 = vmatpush1.msra.mxu0 0.0
    %501 = vmatprep.subr.mxu0 0.0
    %502 = vmatpush1.msra.mxu0 0.0
    %503 = vmatprep.subr.mxu0 0.0
    %504 = vmatpush1.msra.mxu0 0.0
    %505 = vmatprep.subr.mxu0 0.0
    %506 = vmatpush1.msra.mxu0 0.0
    %507 = vmatprep.subr.mxu0 0.0
    %508 = vmatpush1.msra.mxu0 0.0
    %509 = vmatprep.subr.mxu0 0.0
    %510 = vmatpush1.msra.mxu0 0.0
    %511 = vmatprep.subr.mxu0 0.0
    %512 = vmatpush1.msra.mxu0 0.0
    %513 = vmatprep.subr.mxu0 0.0
    %514 = vmatpush1.msra.mxu0 0.0
    %515 = vmatprep.subr.mxu0 0.0
    %516 = vmatpush1.msra.mxu0 0.0
    %517 = vmatprep.subr.mxu0 0.0
    %518 = vmatpush1.msra.mxu0 0.0
    %519 = vmatprep.subr.mxu0 0.0
    %520 = vmatpush1.msra.mxu0 0.0
    %521 = vmatprep.subr.mxu0 0.0
    %522 = vmatpush1.msra.mxu0 0.0
    %523 = vmatprep.subr.mxu0 0.0
    %524 = vmatpush1.msra.mxu0 0.0
    %525 = vmatprep.subr.mxu0 0.0
    %526 = vmatpush1.msra.mxu0 0.0
    %527 = vmatprep.subr.mxu0 0.0
    %528 = vmatpush1.msra.mxu0 0.0
    %529 = vmatprep.subr.mxu0 0.0
    %530 = vmatpush1.msra.mxu0 0.0
    %531 = vmatprep.subr.mxu0 0.0
    %532 = vmatpush1.msra.mxu0 0.0
    %533 = vmatprep.subr.mxu0 0.0
    %534 = vmatpush1.msra.mxu0 0.0
    %535 = vmatprep.subr.mxu0 0.0
    %536 = vmatpush1.msra.mxu0 0.0
    %537 = vmatprep.subr.mxu0 0.0
    %538 = vmatpush1.msra.mxu0 0.0
    %539 = vmatprep.subr.mxu0 0.0
    %540 = vmatpush1.msra.mxu0 0.0
    %541 = vmatprep.mubr.f32.mxu0 0.0
    %542 = vmatmul.mubr.f32.gmra.mrb[0].mxu0 %v475
    %v543 = vpop.f32.mrb[0].mxu0
    %v544 = vadd.f32 %v445, %v543
    %v545 = vpop.f32.mrb[0].mxu0
    %v546 = vadd.f32 %v449, %v545
    %547 = vdwg.mxu0
    %548 = vmatprep.subr.mxu0 %v413
    %549 = vmatpush1.msra.mxu0 %v412
    %550 = vmatprep.subr.mxu0 %v421
    %551 = vmatpush1.msra.mxu0 %v420
    %552 = vmatprep.subr.mxu0 %v429
    %553 = vmatpush1.msra.mxu0 %v428
    %554 = vmatprep.subr.mxu0 %v437
    %555 = vmatpush1.msra.mxu0 %v436
    %556 = vmatprep.subr.mxu0 0.0
    %557 = vmatpush1.msra.mxu0 0.0
    %558 = vmatprep.subr.mxu0 0.0
    %559 = vmatpush1.msra.mxu0 0.0
    %560 = vmatprep.subr.mxu0 0.0
    %561 = vmatpush1.msra.mxu0 0.0
    %562 = vmatprep.subr.mxu0 0.0
    %563 = vmatpush1.msra.mxu0 0.0
    %564 = vmatprep.subr.mxu0 0.0
    %565 = vmatpush1.msra.mxu0 0.0
    %566 = vmatprep.subr.mxu0 0.0
    %567 = vmatpush1.msra.mxu0 0.0
    %568 = vmatprep.subr.mxu0 0.0
    %569 = vmatpush1.msra.mxu0 0.0
    %570 = vmatprep.subr.mxu0 0.0
    %571 = vmatpush1.msra.mxu0 0.0
    %572 = vmatprep.subr.mxu0 0.0
    %573 = vmatpush1.msra.mxu0 0.0
    %574 = vmatprep.subr.mxu0 0.0
    %575 = vmatpush1.msra.mxu0 0.0
    %576 = vmatprep.subr.mxu0 0.0
    %577 = vmatpush1.msra.mxu0 0.0
    %578 = vmatprep.subr.mxu0 0.0
    %579 = vmatpush1.msra.mxu0 0.0
    %580 = vmatprep.subr.mxu0 0.0
    %581 = vmatpush1.msra.mxu0 0.0
    %582 = vmatprep.subr.mxu0 0.0
    %583 = vmatpush1.msra.mxu0 0.0
    %584 = vmatprep.subr.mxu0 0.0
    %585 = vmatpush1.msra.mxu0 0.0
    %586 = vmatprep.subr.mxu0 0.0
    %587 = vmatpush1.msra.mxu0 0.0
    %588 = vmatprep.subr.mxu0 0.0
    %589 = vmatpush1.msra.mxu0 0.0
    %590 = vmatprep.subr.mxu0 0.0
    %591 = vmatpush1.msra.mxu0 0.0
    %592 = vmatprep.subr.mxu0 0.0
    %593 = vmatpush1.msra.mxu0 0.0
    %594 = vmatprep.subr.mxu0 0.0
    %595 = vmatpush1.msra.mxu0 0.0
    %596 = vmatprep.subr.mxu0 0.0
    %597 = vmatpush1.msra.mxu0 0.0
    %598 = vmatprep.subr.mxu0 0.0
    %599 = vmatpush1.msra.mxu0 0.0
    %600 = vmatprep.subr.mxu0 0.0
    %601 = vmatpush1.msra.mxu0 0.0
    %602 = vmatprep.subr.mxu0 0.0
    %603 = vmatpush1.msra.mxu0 0.0
    %604 = vmatprep.subr.mxu0 0.0
    %605 = vmatpush1.msra.mxu0 0.0
    %606 = vmatprep.subr.mxu0 0.0
    %607 = vmatpush1.msra.mxu0 0.0
    %608 = vmatprep.subr.mxu0 0.0
    %609 = vmatpush1.msra.mxu0 0.0
    %610 = vmatprep.subr.mxu0 0.0
    %611 = vmatpush1.msra.mxu0 0.0
    %612 = vmatprep.mubr.f32.mxu0 0.0
    %613 = vmatmul.mubr.f32.gmra.mrb[0].mxu0 %v475
    %v614 = vpop.f32.mrb[0].mxu0
    %v615 = vadd.f32 %v453, %v614
    %v616 = vpop.f32.mrb[0].mxu0
    %v617 = vadd.f32 %v457, %v616
    %618 = vdwg.mxu0
    %619 = vmatprep.subr.mxu0 %v415
    %620 = vmatpush1.msra.mxu0 %v414
    %621 = vmatprep.subr.mxu0 %v423
    %622 = vmatpush1.msra.mxu0 %v422
    %623 = vmatprep.subr.mxu0 %v431
    %624 = vmatpush1.msra.mxu0 %v430
    %625 = vmatprep.subr.mxu0 %v439
    %626 = vmatpush1.msra.mxu0 %v438
    %627 = vmatprep.subr.mxu0 0.0
    %628 = vmatpush1.msra.mxu0 0.0
    %629 = vmatprep.subr.mxu0 0.0
    %630 = vmatpush1.msra.mxu0 0.0
    %631 = vmatprep.subr.mxu0 0.0
    %632 = vmatpush1.msra.mxu0 0.0
    %633 = vmatprep.subr.mxu0 0.0
    %634 = vmatpush1.msra.mxu0 0.0
    %635 = vmatprep.subr.mxu0 0.0
    %636 = vmatpush1.msra.mxu0 0.0
    %637 = vmatprep.subr.mxu0 0.0
    %638 = vmatpush1.msra.mxu0 0.0
    %639 = vmatprep.subr.mxu0 0.0
    %640 = vmatpush1.msra.mxu0 0.0
    %641 = vmatprep.subr.mxu0 0.0
    %642 = vmatpush1.msra.mxu0 0.0
    %643 = vmatprep.subr.mxu0 0.0
    %644 = vmatpush1.msra.mxu0 0.0
    %645 = vmatprep.subr.mxu0 0.0
    %646 = vmatpush1.msra.mxu0 0.0
    %647 = vmatprep.subr.mxu0 0.0
    %648 = vmatpush1.msra.mxu0 0.0
    %649 = vmatprep.subr.mxu0 0.0
    %650 = vmatpush1.msra.mxu0 0.0
    %651 = vmatprep.subr.mxu0 0.0
    %652 = vmatpush1.msra.mxu0 0.0
    %653 = vmatprep.subr.mxu0 0.0
    %654 = vmatpush1.msra.mxu0 0.0
    %655 = vmatprep.subr.mxu0 0.0
    %656 = vmatpush1.msra.mxu0 0.0
    %657 = vmatprep.subr.mxu0 0.0
    %658 = vmatpush1.msra.mxu0 0.0
    %659 = vmatprep.subr.mxu0 0.0
    %660 = vmatpush1.msra.mxu0 0.0
    %661 = vmatprep.subr.mxu0 0.0
    %662 = vmatpush1.msra.mxu0 0.0
    %663 = vmatprep.subr.mxu0 0.0
    %664 = vmatpush1.msra.mxu0 0.0
    %665 = vmatprep.subr.mxu0 0.0
    %666 = vmatpush1.msra.mxu0 0.0
    %667 = vmatprep.subr.mxu0 0.0
    %668 = vmatpush1.msra.mxu0 0.0
    %669 = vmatprep.subr.mxu0 0.0
    %670 = vmatpush1.msra.mxu0 0.0
    %671 = vmatprep.subr.mxu0 0.0
    %672 = vmatpush1.msra.mxu0 0.0
    %673 = vmatprep.subr.mxu0 0.0
    %674 = vmatpush1.msra.mxu0 0.0
    %675 = vmatprep.subr.mxu0 0.0
    %676 = vmatpush1.msra.mxu0 0.0
    %677 = vmatprep.subr.mxu0 0.0
    %678 = vmatpush1.msra.mxu0 0.0
    %679 = vmatprep.subr.mxu0 0.0
    %680 = vmatpush1.msra.mxu0 0.0
    %681 = vmatprep.subr.mxu0 0.0
    %682 = vmatpush1.msra.mxu0 0.0
    %683 = vmatprep.mubr.f32.mxu0 0.0
    %684 = vmatmul.mubr.f32.gmra.mrb[0].mxu0 %v475
    %v685 = vpop.f32.mrb[0].mxu0
    %v686 = vadd.f32 %v461, %v685
    %v687 = vpop.f32.mrb[0].mxu0
    %v688 = vadd.f32 %v465, %v687
    %689 = vdwg.mxu0
    %690 = vmatprep.subr.mxu0 %v417
    %691 = vmatpush1.msra.mxu0 %v416
    %692 = vmatprep.subr.mxu0 %v425
    %693 = vmatpush1.msra.mxu0 %v424
    %694 = vmatprep.subr.mxu0 %v433
    %695 = vmatpush1.msra.mxu0 %v432
    %696 = vmatprep.subr.mxu0 %v441
    %697 = vmatpush1.msra.mxu0 %v440
    %698 = vmatprep.subr.mxu0 0.0
    %699 = vmatpush1.msra.mxu0 0.0
    %700 = vmatprep.subr.mxu0 0.0
    %701 = vmatpush1.msra.mxu0 0.0
    %702 = vmatprep.subr.mxu0 0.0
    %703 = vmatpush1.msra.mxu0 0.0
    %704 = vmatprep.subr.mxu0 0.0
    %705 = vmatpush1.msra.mxu0 0.0
    %706 = vmatprep.subr.mxu0 0.0
    %707 = vmatpush1.msra.mxu0 0.0
    %708 = vmatprep.subr.mxu0 0.0
    %709 = vmatpush1.msra.mxu0 0.0
    %710 = vmatprep.subr.mxu0 0.0
    %711 = vmatpush1.msra.mxu0 0.0
    %712 = vmatprep.subr.mxu0 0.0
    %713 = vmatpush1.msra.mxu0 0.0
    %714 = vmatprep.subr.mxu0 0.0
    %715 = vmatpush1.msra.mxu0 0.0
    %716 = vmatprep.subr.mxu0 0.0
    %717 = vmatpush1.msra.mxu0 0.0
    %718 = vmatprep.subr.mxu0 0.0
    %719 = vmatpush1.msra.mxu0 0.0
    %720 = vmatprep.subr.mxu0 0.0
    %721 = vmatpush1.msra.mxu0 0.0
    %722 = vmatprep.subr.mxu0 0.0
    %723 = vmatpush1.msra.mxu0 0.0
    %724 = vmatprep.subr.mxu0 0.0
    %725 = vmatpush1.msra.mxu0 0.0
    %726 = vmatprep.subr.mxu0 0.0
    %727 = vmatpush1.msra.mxu0 0.0
    %728 = vmatprep.subr.mxu0 0.0
    %729 = vmatpush1.msra.mxu0 0.0
    %730 = vmatprep.subr.mxu0 0.0
    %731 = vmatpush1.msra.mxu0 0.0
    %732 = vmatprep.subr.mxu0 0.0
    %733 = vmatpush1.msra.mxu0 0.0
    %734 = vmatprep.subr.mxu0 0.0
    %735 = vmatpush1.msra.mxu0 0.0
    %736 = vmatprep.subr.mxu0 0.0
    %737 = vmatpush1.msra.mxu0 0.0
    %738 = vmatprep.subr.mxu0 0.0
    %739 = vmatpush1.msra.mxu0 0.0
    %740 = vmatprep.subr.mxu0 0.0
    %741 = vmatpush1.msra.mxu0 0.0
    %742 = vmatprep.subr.mxu0 0.0
    %743 = vmatpush1.msra.mxu0 0.0
    %744 = vmatprep.subr.mxu0 0.0
    %745 = vmatpush1.msra.mxu0 0.0
    %746 = vmatprep.subr.mxu0 0.0
    %747 = vmatpush1.msra.mxu0 0.0
    %748 = vmatprep.subr.mxu0 0.0
    %749 = vmatpush1.msra.mxu0 0.0
    %750 = vmatprep.subr.mxu0 0.0
    %751 = vmatpush1.msra.mxu0 0.0
    %752 = vmatprep.subr.mxu0 0.0
    %753 = vmatpush1.msra.mxu0 0.0
    %754 = vmatprep.mubr.f32.mxu0 0.0
    %755 = vmatmul.mubr.f32.gmra.mrb[0].mxu0 %v475
    %v756 = vpop.f32.mrb[0].mxu0
    %v757 = vadd.f32 %v469, %v756
    %v758 = vpop.f32.mrb[0].mxu0
    %v759 = vadd.f32 %v473, %v758
    %760 = vdwg.mxu0
    %v761 = vsel %vm324, %v118, 0.0
    %762 = vadd.xlane.f32.xlu0 %v761
    %v763 = vpop.xlane.xlu0 %762
    %v764 = vrcp.pop 32.0
    %v765 = vmul.f32 %v763, %v764
    %v766 = vsub.f32 %v118, %v765
    %v767 = vmul.f32 %v766, %v766
    %v768 = vsel %vm324, %v767, 0.0
    %769 = vadd.xlane.f32.xlu0 %v768
    %v770 = vpop.xlane.xlu0 %769
    %v771 = vmul.f32 %v770, %v764
    %v772 = vadd.f32 %v771, 1e-06
    %v773 = vrsqrt.pop %v772
    %v774 = vmul.f32 %v766, %v773
    %v775 = vlaneseq
    %v776 = vshrl.u32 %v775, 7
    %v777 = vsub.s32 0, %v776
    %v778 = vrot.slane %v30, %v777
    %v779 = vmul.f32 %v774, %v778
    %v780 = vlaneseq
    %v781 = vshrl.u32 %v780, 7
    %v782 = vsub.s32 2, %v781
    %v783 = vrot.slane %v30, %v782
    %v784 = vadd.f32 %v779, %v783
    %v785 = vadd.f32 %v546, 1.0
    %v786 = vmul.f32 %v784, %v785
    %v787 = vadd.f32 %v786, %v544
    %v788 = vld [vmem:[%s1 + $0x220] sm:$0xff]
    %v789 = vld [vmem:[%s1 + $0x228] sm:$0xff]
    %v790 = vld [vmem:[%s1 + $0x230] sm:$0xff]
    %v791 = vld [vmem:[%s1 + $0x238] sm:$0xff]
    %v792 = vlaneseq
    %v793 = vshrl.u32 %v792, 7
    %v794 = vsub.s32 4, %v793
    %v795 = vrot.slane %v22, %v794
    %v797 = vsel %vm324, %v787, 0
    %799 = vmatprep.subr.mxu0 0.0
    %800 = vmatpush1.msra.mxu0 %v788
    %801 = vmatprep.subr.mxu0 0.0
    %802 = vmatpush1.msra.mxu0 %v789
    %803 = vmatprep.subr.mxu0 0.0
    %804 = vmatpush1.msra.mxu0 %v790
    %805 = vmatprep.subr.mxu0 0.0
    %806 = vmatpush1.msra.mxu0 %v791
    %807 = vmatprep.subr.mxu0 0.0
    %808 = vmatpush1.msra.mxu0 0.0
    %809 = vmatprep.subr.mxu0 0.0
    %810 = vmatpush1.msra.mxu0 0.0
    %811 = vmatprep.subr.mxu0 0.0
    %812 = vmatpush1.msra.mxu0 0.0
    %813 = vmatprep.subr.mxu0 0.0
    %814 = vmatpush1.msra.mxu0 0.0
    %815 = vmatprep.subr.mxu0 0.0
    %816 = vmatpush1.msra.mxu0 0.0
    %817 = vmatprep.subr.mxu0 0.0
    %818 = vmatpush1.msra.mxu0 0.0
    %819 = vmatprep.subr.mxu0 0.0
    %820 = vmatpush1.msra.mxu0 0.0
    %821 = vmatprep.subr.mxu0 0.0
    %822 = vmatpush1.msra.mxu0 0.0
    %823 = vmatprep.subr.mxu0 0.0
    %824 = vmatpush1.msra.mxu0 0.0
    %825 = vmatprep.subr.mxu0 0.0
    %826 = vmatpush1.msra.mxu0 0.0
    %827 = vmatprep.subr.mxu0 0.0
    %828 = vmatpush1.msra.mxu0 0.0
    %829 = vmatprep.subr.mxu0 0.0
    %830 = vmatpush1.msra.mxu0 0.0
    %831 = vmatprep.subr.mxu0 0.0
    %832 = vmatpush1.msra.mxu0 0.0
    %833 = vmatprep.subr.mxu0 0.0
    %834 = vmatpush1.msra.mxu0 0.0
    %835 = vmatprep.subr.mxu0 0.0
    %836 = vmatpush1.msra.mxu0 0.0
    %837 = vmatprep.subr.mxu0 0.0
    %838 = vmatpush1.msra.mxu0 0.0
    %839 = vmatprep.subr.mxu0 0.0
    %840 = vmatpush1.msra.mxu0 0.0
    %841 = vmatprep.subr.mxu0 0.0
    %842 = vmatpush1.msra.mxu0 0.0
    %843 = vmatprep.subr.mxu0 0.0
    %844 = vmatpush1.msra.mxu0 0.0
    %845 = vmatprep.subr.mxu0 0.0
    %846 = vmatpush1.msra.mxu0 0.0
    %847 = vmatprep.subr.mxu0 0.0
    %848 = vmatpush1.msra.mxu0 0.0
    %849 = vmatprep.subr.mxu0 0.0
    %850 = vmatpush1.msra.mxu0 0.0
    %851 = vmatprep.subr.mxu0 0.0
    %852 = vmatpush1.msra.mxu0 0.0
    %853 = vmatprep.subr.mxu0 0.0
    %854 = vmatpush1.msra.mxu0 0.0
    %855 = vmatprep.subr.mxu0 0.0
    %856 = vmatpush1.msra.mxu0 0.0
    %857 = vmatprep.subr.mxu0 0.0
    %858 = vmatpush1.msra.mxu0 0.0
    %859 = vmatprep.subr.mxu0 0.0
    %860 = vmatpush1.msra.mxu0 0.0
    %861 = vmatprep.subr.mxu0 0.0
    %862 = vmatpush1.msra.mxu0 0.0
    %863 = vmatprep.mubr.f32.mxu0 0.0
    %864 = vmatmul.mubr.f32.gmra.mrb[0].mxu0 %v797
    %v865 = vpop.f32.mrb[0].mxu0
    %v866 = vadd.f32 %v795, %v865
    %v867 = vpop.f32.mrb[0].mxu0
    %868 = vdwg.mxu0
    %v869 = vxor.u32 %v866, 2147483648
    %v870 = vmul.f32 %v869, 1.442695
    %v871 = vpow.pop %v870
    %v872 = vadd.f32 %v871, 1.0
    %v873 = vrcp.pop %v872
    %v874 = vmul.f32 1.0, %v873
    %v875 = vmul.f32 %v866, %v874
    %v876 = vld [vmem:[%s1 + $0x240] sm:$0xff]
    %v877 = vld [vmem:[%s1 + $0x248] sm:$0xff]
    %v878 = vld [vmem:[%s1 + $0x250] sm:$0xff]
    %v879 = vld [vmem:[%s1 + $0x258] sm:$0xff]
    %v880 = vlaneseq
    %v881 = vshrl.u32 %v880, 7
    %v882 = vsub.s32 6, %v881
    %v883 = vrot.slane %v22, %v882
    %v885 = vsel %vm324, %v875, 0
    %887 = vmatprep.subr.mxu0 0.0
    %888 = vmatpush1.msra.mxu0 %v876
    %889 = vmatprep.subr.mxu0 0.0
    %890 = vmatpush1.msra.mxu0 %v877
    %891 = vmatprep.subr.mxu0 0.0
    %892 = vmatpush1.msra.mxu0 %v878
    %893 = vmatprep.subr.mxu0 0.0
    %894 = vmatpush1.msra.mxu0 %v879
    %895 = vmatprep.subr.mxu0 0.0
    %896 = vmatpush1.msra.mxu0 0.0
    %897 = vmatprep.subr.mxu0 0.0
    %898 = vmatpush1.msra.mxu0 0.0
    %899 = vmatprep.subr.mxu0 0.0
    %900 = vmatpush1.msra.mxu0 0.0
    %901 = vmatprep.subr.mxu0 0.0
    %902 = vmatpush1.msra.mxu0 0.0
    %903 = vmatprep.subr.mxu0 0.0
    %904 = vmatpush1.msra.mxu0 0.0
    %905 = vmatprep.subr.mxu0 0.0
    %906 = vmatpush1.msra.mxu0 0.0
    %907 = vmatprep.subr.mxu0 0.0
    %908 = vmatpush1.msra.mxu0 0.0
    %909 = vmatprep.subr.mxu0 0.0
    %910 = vmatpush1.msra.mxu0 0.0
    %911 = vmatprep.subr.mxu0 0.0
    %912 = vmatpush1.msra.mxu0 0.0
    %913 = vmatprep.subr.mxu0 0.0
    %914 = vmatpush1.msra.mxu0 0.0
    %915 = vmatprep.subr.mxu0 0.0
    %916 = vmatpush1.msra.mxu0 0.0
    %917 = vmatprep.subr.mxu0 0.0
    %918 = vmatpush1.msra.mxu0 0.0
    %919 = vmatprep.subr.mxu0 0.0
    %920 = vmatpush1.msra.mxu0 0.0
    %921 = vmatprep.subr.mxu0 0.0
    %922 = vmatpush1.msra.mxu0 0.0
    %923 = vmatprep.subr.mxu0 0.0
    %924 = vmatpush1.msra.mxu0 0.0
    %925 = vmatprep.subr.mxu0 0.0
    %926 = vmatpush1.msra.mxu0 0.0
    %927 = vmatprep.subr.mxu0 0.0
    %928 = vmatpush1.msra.mxu0 0.0
    %929 = vmatprep.subr.mxu0 0.0
    %930 = vmatpush1.msra.mxu0 0.0
    %931 = vmatprep.subr.mxu0 0.0
    %932 = vmatpush1.msra.mxu0 0.0
    %933 = vmatprep.subr.mxu0 0.0
    %934 = vmatpush1.msra.mxu0 0.0
    %935 = vmatprep.subr.mxu0 0.0
    %936 = vmatpush1.msra.mxu0 0.0
    %937 = vmatprep.subr.mxu0 0.0
    %938 = vmatpush1.msra.mxu0 0.0
    %939 = vmatprep.subr.mxu0 0.0
    %940 = vmatpush1.msra.mxu0 0.0
    %941 = vmatprep.subr.mxu0 0.0
    %942 = vmatpush1.msra.mxu0 0.0
    %943 = vmatprep.subr.mxu0 0.0
    %944 = vmatpush1.msra.mxu0 0.0
    %945 = vmatprep.subr.mxu0 0.0
    %946 = vmatpush1.msra.mxu0 0.0
    %947 = vmatprep.subr.mxu0 0.0
    %948 = vmatpush1.msra.mxu0 0.0
    %949 = vmatprep.subr.mxu0 0.0
    %950 = vmatpush1.msra.mxu0 0.0
    %951 = vmatprep.mubr.f32.mxu0 0.0
    %952 = vmatmul.mubr.f32.gmra.mrb[0].mxu0 %v885
    %v953 = vpop.f32.mrb[0].mxu0
    %v954 = vadd.f32 %v883, %v953
    %v955 = vpop.f32.mrb[0].mxu0
    %956 = vdwg.mxu0
    %v957 = vmul.f32 %v615, %v954
    %v958 = vadd.f32 %v118, %v957
    %v959 = vsel %vm324, %v958, 0.0
    %960 = vadd.xlane.f32.xlu0 %v959
    %v961 = vpop.xlane.xlu0 %960
    %v962 = vmul.f32 %v961, %v764
    %v963 = vsub.f32 %v958, %v962
    %v964 = vmul.f32 %v963, %v963
    %v965 = vsel %vm324, %v964, 0.0
    %966 = vadd.xlane.f32.xlu0 %v965
    %v967 = vpop.xlane.xlu0 %966
    %v968 = vmul.f32 %v967, %v764
    %v969 = vadd.f32 %v968, 1e-06
    %v970 = vrsqrt.pop %v969
    %v971 = vmul.f32 %v963, %v970
    %v972 = vlaneseq
    %v973 = vshrl.u32 %v972, 7
    %v974 = vsub.s32 1, %v973
    %v975 = vrot.slane %v30, %v974
    %v976 = vmul.f32 %v971, %v975
    %v977 = vlaneseq
    %v978 = vshrl.u32 %v977, 7
    %v979 = vsub.s32 3, %v978
    %v980 = vrot.slane %v30, %v979
    %v981 = vadd.f32 %v976, %v980
    %v982 = vadd.f32 %v686, 1.0
    %v983 = vmul.f32 %v981, %v982
    %v984 = vadd.f32 %v983, %v617
    %v985 = vld [vmem:[%s1 + $0x260] sm:$0xff]
    %v986 = vld [vmem:[%s1 + $0x268] sm:$0xff]
    %v987 = vld [vmem:[%s1 + $0x270] sm:$0xff]
    %v988 = vld [vmem:[%s1 + $0x278] sm:$0xff]
    %v989 = vlaneseq
    %v990 = vshrl.u32 %v989, 7
    %v991 = vsub.s32 5, %v990
    %v992 = vrot.slane %v22, %v991
    %v994 = vsel %vm324, %v984, 0
    %996 = vmatprep.subr.mxu0 0.0
    %997 = vmatpush1.msra.mxu0 %v985
    %998 = vmatprep.subr.mxu0 0.0
    %999 = vmatpush1.msra.mxu0 %v986
    %1000 = vmatprep.subr.mxu0 0.0
    %1001 = vmatpush1.msra.mxu0 %v987
    %1002 = vmatprep.subr.mxu0 0.0
    %1003 = vmatpush1.msra.mxu0 %v988
    %1004 = vmatprep.subr.mxu0 0.0
    %1005 = vmatpush1.msra.mxu0 0.0
    %1006 = vmatprep.subr.mxu0 0.0
    %1007 = vmatpush1.msra.mxu0 0.0
    %1008 = vmatprep.subr.mxu0 0.0
    %1009 = vmatpush1.msra.mxu0 0.0
    %1010 = vmatprep.subr.mxu0 0.0
    %1011 = vmatpush1.msra.mxu0 0.0
    %1012 = vmatprep.subr.mxu0 0.0
    %1013 = vmatpush1.msra.mxu0 0.0
    %1014 = vmatprep.subr.mxu0 0.0
    %1015 = vmatpush1.msra.mxu0 0.0
    %1016 = vmatprep.subr.mxu0 0.0
    %1017 = vmatpush1.msra.mxu0 0.0
    %1018 = vmatprep.subr.mxu0 0.0
    %1019 = vmatpush1.msra.mxu0 0.0
    %1020 = vmatprep.subr.mxu0 0.0
    %1021 = vmatpush1.msra.mxu0 0.0
    %1022 = vmatprep.subr.mxu0 0.0
    %1023 = vmatpush1.msra.mxu0 0.0
    %1024 = vmatprep.subr.mxu0 0.0
    %1025 = vmatpush1.msra.mxu0 0.0
    %1026 = vmatprep.subr.mxu0 0.0
    %1027 = vmatpush1.msra.mxu0 0.0
    %1028 = vmatprep.subr.mxu0 0.0
    %1029 = vmatpush1.msra.mxu0 0.0
    %1030 = vmatprep.subr.mxu0 0.0
    %1031 = vmatpush1.msra.mxu0 0.0
    %1032 = vmatprep.subr.mxu0 0.0
    %1033 = vmatpush1.msra.mxu0 0.0
    %1034 = vmatprep.subr.mxu0 0.0
    %1035 = vmatpush1.msra.mxu0 0.0
    %1036 = vmatprep.subr.mxu0 0.0
    %1037 = vmatpush1.msra.mxu0 0.0
    %1038 = vmatprep.subr.mxu0 0.0
    %1039 = vmatpush1.msra.mxu0 0.0
    %1040 = vmatprep.subr.mxu0 0.0
    %1041 = vmatpush1.msra.mxu0 0.0
    %1042 = vmatprep.subr.mxu0 0.0
    %1043 = vmatpush1.msra.mxu0 0.0
    %1044 = vmatprep.subr.mxu0 0.0
    %1045 = vmatpush1.msra.mxu0 0.0
    %1046 = vmatprep.subr.mxu0 0.0
    %1047 = vmatpush1.msra.mxu0 0.0
    %1048 = vmatprep.subr.mxu0 0.0
    %1049 = vmatpush1.msra.mxu0 0.0
    %1050 = vmatprep.subr.mxu0 0.0
    %1051 = vmatpush1.msra.mxu0 0.0
    %1052 = vmatprep.subr.mxu0 0.0
    %1053 = vmatpush1.msra.mxu0 0.0
    %1054 = vmatprep.subr.mxu0 0.0
    %1055 = vmatpush1.msra.mxu0 0.0
    %1056 = vmatprep.subr.mxu0 0.0
    %1057 = vmatpush1.msra.mxu0 0.0
    %1058 = vmatprep.subr.mxu0 0.0
    %1059 = vmatpush1.msra.mxu0 0.0
    %1060 = vmatprep.mubr.f32.mxu0 0.0
    %1061 = vmatmul.mubr.f32.gmra.mrb[0].mxu0 %v994
    %v1062 = vpop.f32.mrb[0].mxu0
    %v1063 = vadd.f32 %v992, %v1062
    %v1064 = vpop.f32.mrb[0].mxu0
    %1065 = vdwg.mxu0
    %v1066 = vxor.u32 %v1063, 2147483648
    %v1067 = vmul.f32 %v1066, 1.442695
    %v1068 = vpow.pop %v1067
    %v1069 = vadd.f32 %v1068, 1.0
    %v1070 = vrcp.pop %v1069
    %v1071 = vmul.f32 1.0, %v1070
    %v1072 = vmul.f32 %v1063, %v1071
    %v1073 = vld [vmem:[%s1 + $0x280] sm:$0xff]
    %v1074 = vld [vmem:[%s1 + $0x288] sm:$0xff]
    %v1075 = vld [vmem:[%s1 + $0x290] sm:$0xff]
    %v1076 = vld [vmem:[%s1 + $0x298] sm:$0xff]
    %v1077 = vlaneseq
    %v1078 = vshrl.u32 %v1077, 7
    %v1079 = vsub.s32 7, %v1078
    %v1080 = vrot.slane %v22, %v1079
    %v1082 = vsel %vm324, %v1072, 0
    %1084 = vmatprep.subr.mxu0 0.0
    %1085 = vmatpush1.msra.mxu0 %v1073
    %1086 = vmatprep.subr.mxu0 0.0
    %1087 = vmatpush1.msra.mxu0 %v1074
    %1088 = vmatprep.subr.mxu0 0.0
    %1089 = vmatpush1.msra.mxu0 %v1075
    %1090 = vmatprep.subr.mxu0 0.0
    %1091 = vmatpush1.msra.mxu0 %v1076
    %1092 = vmatprep.subr.mxu0 0.0
    %1093 = vmatpush1.msra.mxu0 0.0
    %1094 = vmatprep.subr.mxu0 0.0
    %1095 = vmatpush1.msra.mxu0 0.0
    %1096 = vmatprep.subr.mxu0 0.0
    %1097 = vmatpush1.msra.mxu0 0.0
    %1098 = vmatprep.subr.mxu0 0.0
    %1099 = vmatpush1.msra.mxu0 0.0
    %1100 = vmatprep.subr.mxu0 0.0
    %1101 = vmatpush1.msra.mxu0 0.0
    %1102 = vmatprep.subr.mxu0 0.0
    %1103 = vmatpush1.msra.mxu0 0.0
    %1104 = vmatprep.subr.mxu0 0.0
    %1105 = vmatpush1.msra.mxu0 0.0
    %1106 = vmatprep.subr.mxu0 0.0
    %1107 = vmatpush1.msra.mxu0 0.0
    %1108 = vmatprep.subr.mxu0 0.0
    %1109 = vmatpush1.msra.mxu0 0.0
    %1110 = vmatprep.subr.mxu0 0.0
    %1111 = vmatpush1.msra.mxu0 0.0
    %1112 = vmatprep.subr.mxu0 0.0
    %1113 = vmatpush1.msra.mxu0 0.0
    %1114 = vmatprep.subr.mxu0 0.0
    %1115 = vmatpush1.msra.mxu0 0.0
    %1116 = vmatprep.subr.mxu0 0.0
    %1117 = vmatpush1.msra.mxu0 0.0
    %1118 = vmatprep.subr.mxu0 0.0
    %1119 = vmatpush1.msra.mxu0 0.0
    %1120 = vmatprep.subr.mxu0 0.0
    %1121 = vmatpush1.msra.mxu0 0.0
    %1122 = vmatprep.subr.mxu0 0.0
    %1123 = vmatpush1.msra.mxu0 0.0
    %1124 = vmatprep.subr.mxu0 0.0
    %1125 = vmatpush1.msra.mxu0 0.0
    %1126 = vmatprep.subr.mxu0 0.0
    %1127 = vmatpush1.msra.mxu0 0.0
    %1128 = vmatprep.subr.mxu0 0.0
    %1129 = vmatpush1.msra.mxu0 0.0
    %1130 = vmatprep.subr.mxu0 0.0
    %1131 = vmatpush1.msra.mxu0 0.0
    %1132 = vmatprep.subr.mxu0 0.0
    %1133 = vmatpush1.msra.mxu0 0.0
    %1134 = vmatprep.subr.mxu0 0.0
    %1135 = vmatpush1.msra.mxu0 0.0
    %1136 = vmatprep.subr.mxu0 0.0
    %1137 = vmatpush1.msra.mxu0 0.0
    %1138 = vmatprep.subr.mxu0 0.0
    %1139 = vmatpush1.msra.mxu0 0.0
    %1140 = vmatprep.subr.mxu0 0.0
    %1141 = vmatpush1.msra.mxu0 0.0
    %1142 = vmatprep.subr.mxu0 0.0
    %1143 = vmatpush1.msra.mxu0 0.0
    %1144 = vmatprep.subr.mxu0 0.0
    %1145 = vmatpush1.msra.mxu0 0.0
    %1146 = vmatprep.subr.mxu0 0.0
    %1147 = vmatpush1.msra.mxu0 0.0
    %1148 = vmatprep.mubr.f32.mxu0 0.0
    %1149 = vmatmul.mubr.f32.gmra.mrb[0].mxu0 %v1082
    %v1150 = vpop.f32.mrb[0].mxu0
    %v1151 = vadd.f32 %v1080, %v1150
    %v1152 = vpop.f32.mrb[0].mxu0
    %1153 = vdwg.mxu0
    %v1154 = vmul.f32 %v688, %v1151
    %v1155 = vadd.f32 %v958, %v1154
    %v1156 = vsel %vm324, %v1155, 0.0
    %1157 = vadd.xlane.f32.xlu0 %v1156
    %v1158 = vpop.xlane.xlu0 %1157
    %v1159 = vmul.f32 %v1158, %v764
    %v1160 = vsub.f32 %v1155, %v1159
    %v1161 = vmul.f32 %v1160, %v1160
    %v1162 = vsel %vm324, %v1161, 0.0
    %1163 = vadd.xlane.f32.xlu0 %v1162
    %v1164 = vpop.xlane.xlu0 %1163
    %v1165 = vmul.f32 %v1164, %v764
    %v1166 = vadd.f32 %v1165, 1e-06
    %v1167 = vrsqrt.pop %v1166
    %v1168 = vmul.f32 %v1160, %v1167
    %v1169 = vadd.f32 %v759, 1.0
    %v1170 = vmul.f32 %v1168, %v1169
    %v1171 = vadd.f32 %v1170, %v757
    %v1172 = vld [vmem:[%s2 + $0x40] sm:$0xff]
    %v1173 = vld [vmem:[%s2 + $0x88] sm:$0xff]
    %v1174 = vld [vmem:[%s2 + $0xd0] sm:$0xff]
    %v1175 = vld [vmem:[%s2 + $0x118] sm:$0xff]
    %v1176 = vlaneseq
    %v1177 = vshrl.u32 %v1176, 7
    %v1178 = vsub.s32 4, %v1177
    %v1179 = vrot.slane %v30, %v1178
    %v1181 = vsel %vm324, %v1171, 0
    %1183 = vmatprep.subr.mxu0 0.0
    %1184 = vmatpush1.msra.mxu0 %v1172
    %1185 = vmatprep.subr.mxu0 0.0
    %1186 = vmatpush1.msra.mxu0 %v1173
    %1187 = vmatprep.subr.mxu0 0.0
    %1188 = vmatpush1.msra.mxu0 %v1174
    %1189 = vmatprep.subr.mxu0 0.0
    %1190 = vmatpush1.msra.mxu0 %v1175
    %1191 = vmatprep.subr.mxu0 0.0
    %1192 = vmatpush1.msra.mxu0 0.0
    %1193 = vmatprep.subr.mxu0 0.0
    %1194 = vmatpush1.msra.mxu0 0.0
    %1195 = vmatprep.subr.mxu0 0.0
    %1196 = vmatpush1.msra.mxu0 0.0
    %1197 = vmatprep.subr.mxu0 0.0
    %1198 = vmatpush1.msra.mxu0 0.0
    %1199 = vmatprep.subr.mxu0 0.0
    %1200 = vmatpush1.msra.mxu0 0.0
    %1201 = vmatprep.subr.mxu0 0.0
    %1202 = vmatpush1.msra.mxu0 0.0
    %1203 = vmatprep.subr.mxu0 0.0
    %1204 = vmatpush1.msra.mxu0 0.0
    %1205 = vmatprep.subr.mxu0 0.0
    %1206 = vmatpush1.msra.mxu0 0.0
    %1207 = vmatprep.subr.mxu0 0.0
    %1208 = vmatpush1.msra.mxu0 0.0
    %1209 = vmatprep.subr.mxu0 0.0
    %1210 = vmatpush1.msra.mxu0 0.0
    %1211 = vmatprep.subr.mxu0 0.0
    %1212 = vmatpush1.msra.mxu0 0.0
    %1213 = vmatprep.subr.mxu0 0.0
    %1214 = vmatpush1.msra.mxu0 0.0
    %1215 = vmatprep.subr.mxu0 0.0
    %1216 = vmatpush1.msra.mxu0 0.0
    %1217 = vmatprep.subr.mxu0 0.0
    %1218 = vmatpush1.msra.mxu0 0.0
    %1219 = vmatprep.subr.mxu0 0.0
    %1220 = vmatpush1.msra.mxu0 0.0
    %1221 = vmatprep.subr.mxu0 0.0
    %1222 = vmatpush1.msra.mxu0 0.0
    %1223 = vmatprep.subr.mxu0 0.0
    %1224 = vmatpush1.msra.mxu0 0.0
    %1225 = vmatprep.subr.mxu0 0.0
    %1226 = vmatpush1.msra.mxu0 0.0
    %1227 = vmatprep.subr.mxu0 0.0
    %1228 = vmatpush1.msra.mxu0 0.0
    %1229 = vmatprep.subr.mxu0 0.0
    %1230 = vmatpush1.msra.mxu0 0.0
    %1231 = vmatprep.subr.mxu0 0.0
    %1232 = vmatpush1.msra.mxu0 0.0
    %1233 = vmatprep.subr.mxu0 0.0
    %1234 = vmatpush1.msra.mxu0 0.0
    %1235 = vmatprep.subr.mxu0 0.0
    %1236 = vmatpush1.msra.mxu0 0.0
    %1237 = vmatprep.subr.mxu0 0.0
    %1238 = vmatpush1.msra.mxu0 0.0
    %1239 = vmatprep.subr.mxu0 0.0
    %1240 = vmatpush1.msra.mxu0 0.0
    %1241 = vmatprep.subr.mxu0 0.0
    %1242 = vmatpush1.msra.mxu0 0.0
    %1243 = vmatprep.subr.mxu0 0.0
    %1244 = vmatpush1.msra.mxu0 0.0
    %1245 = vmatprep.subr.mxu0 0.0
    %1246 = vmatpush1.msra.mxu0 0.0
    %1247 = vmatprep.mubr.f32.mxu0 0.0
    %1248 = vmatmul.mubr.f32.gmra.mrb[0].mxu0 %v1181
    %v1249 = vpop.f32.mrb[0].mxu0
    %v1250 = vadd.f32 %v1179, %v1249
    %v1251 = vpop.f32.mrb[0].mxu0
    %1252 = vdwg.mxu0
    %1253 = vst [vmem:[#allocation2] sm:$0xff] %v1250
    // Predicated region
    $region18: #{simple_mlp_adaln.1} parent=1 // pred_check
      _
    $region19: #{simple_mlp_adaln.1} parent=1 // pred_check_branch
      %1255 = sbr.rel (0) target = $region21
    $region20: #{simple_mlp_adaln.1} parent=1 // pred_region
      %s1257 = ssub.s32 128, 128
      %1258 = vsyncadd [#allocation3], %s1257
      %s1260 = sshll.u32 [#allocation2], 4
      %s1261 = int_to_ptr.vmem [resolvable:$true] %s1260
      %1263 = dma.vmem_to_hbm [thread:$0]  %s1261, 128, %s4, [#allocation3]
    $region21: #{simple_mlp_adaln.1} parent=1 // pred_fallthru
      _
    // Predicated region
    $region22: #{simple_mlp_adaln.1} parent=1 // pred_check
      _
    $region23: #{simple_mlp_adaln.1} parent=1 // pred_check_branch
      %1265 = sbr.rel (0) target = $region25
    $region24: #{simple_mlp_adaln.1} parent=1 // pred_region
      %1266 = dma.done [#allocation3], 128
    $region25: #{simple_mlp_adaln.1} parent=1 // pred_fallthru
      _
    %1267 = vsyncpa [#allocation3], 1

</llo_original>
